<compile_context>
chip_gen: v5e
topology: v5e:2x2
jax: 0.10.0
libtpu: 0.0.40
codegen_flags: <defaults>
</compile_context>

<pallas_src>
import functools

import jax
import jax.numpy as jnp
from jax import lax
from jax.experimental import pallas as pl
from jax.experimental.pallas import tpu as pltpu


def _round_up(a, b):
    return (a + b - 1) // b * b


# ----------------------------------------------------------------------------
# Fused kernel: one (batch image, row tile) per grid step
# ----------------------------------------------------------------------------
def _fused_kernel(x_hbm, col_ref, wa_ref, ba_ref, wb_ref, bb_ref, wc_ref,
                  bc_ref, wd_ref, bd_ref, out_ref, xbuf, pool_acc, sem,
                  *, H, W, TH, L_pad):
    n = pl.program_id(0)              # batch image
    t = pl.program_id(1)              # row tile within the image
    num_t = pl.num_programs(1)
    slot = t % 2
    row_w = TH * W

    # ---- double-buffered halo DMA (window = TH + 6 rows, pre-zero-padded in HBM;
    #      the DMA length is L_pad lanes so the destination is a full buffer) ----
    def tile_copy(tt, s):
        return pltpu.make_async_copy(
            x_hbm.at[n, :, pl.ds(tt * row_w, L_pad)],
            xbuf.at[s],
            sem.at[s])

    @pl.when(t == 0)
    def _prime():                      # first tile of each image: start its own DMA
        tile_copy(0, 0).start()

    @pl.when(t + 1 < num_t)
    def _prefetch():                   # prefetch the next row tile of the same image
        tile_copy(t + 1, 1 - slot).start()

    tile_copy(t, slot).wait()          # wait for the current tile's window

    xw = xbuf[slot]                    # (Cin_p, L_pad) f32, channels x flattened rows

    # ---- masks (computed once, reused by all three convs) ----------------------
    col = col_ref[...]                                   # (1, L_pad) int32, col % W
    mask_l = col > 0                                     # left  neighbour exists
    mask_r = col < (W - 1)                               # right neighbour exists
    lane = lax.broadcasted_iota(jnp.int32, (1, L_pad), 1)
    r0 = t * TH                                          # first output row (image coords)

    def conv3x3(src, w_ref, b_ref, relu):
        """'same' 3x3 conv over the whole window via one im2col matmul.

        src: (C, L_pad) f32, flattened (row*W) spatial on lanes.
        The 9 taps are XLU lane-rolls of src; W-edge wrap is zeroed with the
        precomputed column masks.  Rows outside the window wrap circularly but
        only into window rows that downstream stages never consume.
        """
        pieces = []
        for kh in range(3):
            for kw in range(3):
                d = (kh - 1) * W + (kw - 1)
                p = src if d == 0 else pltpu.roll(src, shift=(-d) % L_pad, axis=1)
                if kw == 0:
                    p = jnp.where(mask_l, p, 0.0)
                elif kw == 2:
                    p = jnp.where(mask_r, p, 0.0)
                pieces.append(p)
        patches = jnp.concatenate(pieces, axis=0).astype(w_ref.dtype)  # (9*C, L_pad)
        out = jnp.dot(w_ref[...], patches, preferred_element_type=jnp.float32)
        out = out + b_ref[...]
        return jnp.maximum(out, 0.0) if relu else out

    # ---- UNet conv1 + ReLU ------------------------------------------------------
    h = conv3x3(xw, wa_ref, ba_ref, relu=True)            # (C1_p, L_pad)
    # conv2 zero-pads h itself (padding=1), so h rows outside the image must be 0.
    hmask = jnp.logical_and(lane >= (3 - r0) * W, lane < (H + 3 - r0) * W)
    h = jnp.where(hmask, h, 0.0)

    # ---- UNet conv2 -> per-pixel class logits (kept f32 for softmax parity) -----
    logits = conv3x3(h, wb_ref, bb_ref, relu=False)        # (n_cls, L_pad)

    # ---- softmax over classes, channel max, (attention + 1) * x -----------------
    # max_c softmax(logits)_c == 1 / sum_c exp(logits_c - max_c logits)   (exact)
    m = jnp.max(logits, axis=0, keepdims=True)
    denom = jnp.sum(jnp.exp(logits - m), axis=0, keepdims=True)
    attn = pl.reciprocal(denom, approx=True)               # (1, L_pad), EUP
    combined = (attn + 1.0) * xw                           # zero outside the image

    # ---- CNN conv + ReLU ---------------------------------------------------------
    c = conv3x3(combined, wc_ref, bc_ref, relu=True)       # (C3, L_pad)

    # ---- masked partial global-average-pool (ragged tail handled by the mask) ---
    nrows = jnp.minimum(TH, H - r0)
    pmask = jnp.logical_and(lane >= 3 * W, lane < (3 + nrows) * W)
    psum = jnp.sum(jnp.where(pmask, c, 0.0), axis=1, keepdims=True)    # (C3, 1)

    @pl.when(t == 0)
    def _init_pool():
        pool_acc[...] = jnp.zeros_like(pool_acc)

    pool_acc[...] += psum

    # ---- finalize on the last row tile: mean-pool + linear head ------------------
    @pl.when(t == num_t - 1)
    def _finalize():
        pooled = pool_acc[...] * (1.0 / float(H * W))                  # (C3, 1)
        y = jnp.sum(wd_ref[...] * pooled, axis=0, keepdims=True)       # (1, n_out)
        out_ref[0] = y + bd_ref[...]


# ----------------------------------------------------------------------------
# Wrapper: CombinedModel.forward
# ----------------------------------------------------------------------------
def _prep_conv(w, b, cin_p, cout_p, dtype):
    """(Cout, Cin, 3, 3) torch conv weight -> (Cout_p, 9*Cin_p) im2col matrix."""
    co, ci = w.shape[0], w.shape[1]
    wt = jnp.transpose(w, (2, 3, 1, 0))                                   # (3,3,ci,co)
    wt = jnp.pad(wt, ((0, 0), (0, 0), (0, cin_p - ci), (0, cout_p - co)))
    wmat = wt.reshape(9 * cin_p, cout_p).T.astype(dtype)
    bcol = jnp.pad(b, (0, cout_p - co)).reshape(cout_p, 1).astype(jnp.float32)
    return wmat, bcol


def combined_forward(x_nchw, params, *, row_tile_rows=None):
    x = x_nchw.astype(jnp.float32)                      # NCHW (PyTorch layout)
    N, Cin, H, W = x.shape

    C1 = params["u_w1"].shape[0]
    n_cls = params["u_w2"].shape[0]
    C3 = params["c_w1"].shape[0]
    n_out = params["c_w2"].shape[1]

    Cin_p = _round_up(Cin, 8)        # sublane-aligned channel blocks for the im2col concat
    C1_p = _round_up(C1, 8)

    # ---- row tile size: any TH (ceil-div grid + masked ragged tail), sized against
    #      a conservative per-step VMEM working-set budget (safe for v7x's 64 MiB). ----
    per_row = 4 * W * (2 * Cin_p + 2 * 9 * max(Cin_p, C1_p)
                       + Cin_p + C1_p + n_cls + C3 + 8)
    if row_tile_rows is None:
        budget = 20 * 2**20
        TH = max(1, min(H, budget // per_row - 6))
    else:
        TH = max(1, min(H, int(row_tile_rows)))
    T = (H + TH - 1) // TH

    Rwin = TH + 6                       # 3-row halo each side (3 stacked 3x3 convs)
    L = Rwin * W
    L_pad = _round_up(L, 128)           # lane-aligned flattened window
    extra = (L_pad - L + W - 1) // W    # rows over-read so every DMA is exactly L_pad lanes
    Hpad = T * TH + 6 + extra

    # Pre-pad once in HBM: channels -> Cin_p, rows -> halo + ragged tail + over-read.
    xp = jnp.pad(x, ((0, 0), (0, Cin_p - Cin), (3, Hpad - 3 - H), (0, 0)))
    x_flat = xp.reshape(N, Cin_p, Hpad * W)

    # Column index (mod W) along the flattened window -> W-edge masks in the kernel.
    col_ids = (jnp.arange(L_pad, dtype=jnp.int32) % W).reshape(1, L_pad)

    # Conv weights reshaped once to (Cout, 9*Cin_p): a single im2col matmul per conv.
    # conv1/conv3 use bf16 MXU inputs; conv2 (feeds the softmax attention) stays f32.
    wa, ba = _prep_conv(params["u_w1"], params["u_b1"], Cin_p, C1_p, jnp.bfloat16)
    wb, bb = _prep_conv(params["u_w2"], params["u_b2"], C1_p, n_cls, jnp.float32)
    wc, bc = _prep_conv(params["c_w1"], params["c_b1"], Cin_p, C3, jnp.bfloat16)
    wd = params["c_w2"].astype(jnp.float32)                      # (C3, n_out)
    bd = params["c_b2"].reshape(1, n_out).astype(jnp.float32)

    est = per_row * Rwin + 2 * 2**20
    vmem_limit = int(min(48 * 2**20, max(24 * 2**20, 2 * est)))

    kernel = functools.partial(_fused_kernel, H=H, W=W, TH=TH, L_pad=L_pad)

    # TODO(synk): for batch-1 inference on v7x (2 TensorCores) the row-tile axis could
    # also be made "parallel" by emitting per-tile partial pools and finishing the
    # mean + linear head in the wrapper; kept "arbitrary" here so the pool accumulator
    # and the linear head stay fused in the kernel.
    out = pl.pallas_call(
        kernel,
        out_shape=jax.ShapeDtypeStruct((N, 1, n_out), jnp.float32),
        grid=(N, T),
        in_specs=[
            pl.BlockSpec(memory_space=pl.ANY),                  # x stays in HBM (manual DMA)
            pl.BlockSpec((1, L_pad), lambda n, t: (0, 0)),      # column ids
            pl.BlockSpec(wa.shape, lambda n, t: (0, 0)),        # conv1 w
            pl.BlockSpec(ba.shape, lambda n, t: (0, 0)),        # conv1 b
            pl.BlockSpec(wb.shape, lambda n, t: (0, 0)),        # conv2 w
            pl.BlockSpec(bb.shape, lambda n, t: (0, 0)),        # conv2 b
            pl.BlockSpec(wc.shape, lambda n, t: (0, 0)),        # conv3 w
            pl.BlockSpec(bc.shape, lambda n, t: (0, 0)),        # conv3 b
            pl.BlockSpec(wd.shape, lambda n, t: (0, 0)),        # linear w
            pl.BlockSpec(bd.shape, lambda n, t: (0, 0)),        # linear b
        ],
        out_specs=pl.BlockSpec((1, 1, n_out), lambda n, t: (n, 0, 0)),
        scratch_shapes=[
            pltpu.VMEM((2, Cin_p, L_pad), jnp.float32),         # double-buffered x window
            pltpu.VMEM((C3, 1), jnp.float32),                   # pooled-sum accumulator
            pltpu.SemaphoreType.DMA((2,)),                      # one DMA sem per slot
        ],
        compiler_params=pltpu.CompilerParams(
            dimension_semantics=("parallel", "arbitrary"),
            vmem_limit_bytes=vmem_limit),
    )(x_flat, col_ids, wa, ba, wb, bb, wc, bc, wd, bd)

    return out.reshape(N, n_out)


# ----------------------------------------------------------------------------
# Pure-JAX (XLA) reference of the same forward pass, for self-checking
# ----------------------------------------------------------------------------
def _reference_forward(x_nchw, params):
    def conv(x, w, b):
        y = lax.conv_general_dilated(x, w, (1, 1), ((1, 1), (1, 1)),
                                     dimension_numbers=("NCHW", "OIHW", "NCHW"))
        return y + b[None, :, None, None]

    h = jax.nn.relu(conv(x_nchw, params["u_w1"], params["u_b1"]))
    logits = conv(h, params["u_w2"], params["u_b2"])
    probs = jax.nn.softmax(logits, axis=1)
    attn = jnp.max(probs, axis=1, keepdims=True)
    combined = (attn + 1.0) * x_nchw
    c = jax.nn.relu(conv(combined, params["c_w1"], params["c_b1"]))
    pooled = jnp.mean(c, axis=(2, 3))
    return pooled @ params["c_w2"] + params["c_b2"]


# ----------------------------------------------------------------------------
# Deterministic parameter init
# ----------------------------------------------------------------------------
def init_params(key, cin=4, u_hidden=8, n_cls=3, c_hidden=8, n_out=5):
    ks = jax.random.split(key, 8)

    def conv_w(k, co, ci):
        return jax.random.normal(k, (co, ci, 3, 3), jnp.float32) / jnp.sqrt(9.0 * ci)

    def lin_w(k, ci, co):
        return jax.random.normal(k, (ci, co), jnp.float32) / jnp.sqrt(1.0 * ci)

    return {
        "u_w1": conv_w(ks[0], u_hidden, cin),
        "u_b1": jax.random.normal(ks[1], (u_hidden,), jnp.float32) * 0.01,
        "u_w2": conv_w(ks[2], n_cls, u_hidden),
        "u_b2": jax.random.normal(ks[3], (n_cls,), jnp.float32) * 0.01,
        "c_w1": conv_w(ks[4], c_hidden, cin),
        "c_b1": jax.random.normal(ks[5], (c_hidden,), jnp.float32) * 0.01,
        "c_w2": lin_w(ks[6], c_hidden, n_out),
        "c_b2": jax.random.normal(ks[7], (n_out,), jnp.float32) * 0.01,
    }


if __name__ == "__main__":
    key = jax.random.PRNGKey(0)
    kx, kp = jax.random.split(key)
    x = jax.random.normal(kx, (2, 4, 16, 16), jnp.float32)   # NCHW, PyTorch layout
    params = init_params(kp, cin=4)

    ref = _reference_forward(x, params)

    # Config A: whole image per grid step (T = 1), the common fast path.
    out_a = jax.jit(combined_forward)(x, params)
    jax.block_until_ready(out_a)
    assert out_a.shape == (2, 5)

    # Config B: TH = 6 -> 3 row tiles with a ragged tail; exercises the halo DMA,
    # the double-buffered prefetch and the cross-tile pool accumulation.
    out_b = jax.jit(functools.partial(combined_forward, row_tile_rows=6))(x, params)
    jax.block_until_ready(out_b)
    assert out_b.shape == (2, 5)

    def max_err(a, b):
        return float(jnp.max(jnp.abs(a - b) / (1.0 + jnp.abs(b))))

    err_a = max_err(out_a, ref)
    err_b = max_err(out_b, ref)
    assert err_a < 5e-2, f"config A max rel err {err_a}"
    assert err_b < 5e-2, f"config B max rel err {err_b}"

    print("KERNEL_OK")
</pallas_src>

<mosaic_0001>
module attributes {stable_mosaic.version = 11 : i64} {
  func.func @_fused_kernel(%arg0: i32, %arg1: i32, %arg2: memref<2x8x384xf32, #tpu.memory_space<any>>, %arg3: memref<1x384xi32, #tpu.memory_space<vmem>>, %arg4: memref<8x72xbf16, #tpu.memory_space<vmem>>, %arg5: memref<8x1xf32, #tpu.memory_space<vmem>>, %arg6: memref<3x72xf32, #tpu.memory_space<vmem>>, %arg7: memref<3x1xf32, #tpu.memory_space<vmem>>, %arg8: memref<8x72xbf16, #tpu.memory_space<vmem>>, %arg9: memref<8x1xf32, #tpu.memory_space<vmem>>, %arg10: memref<8x5xf32, #tpu.memory_space<vmem>>, %arg11: memref<1x5xf32, #tpu.memory_space<vmem>>, %arg12: memref<1x1x5xf32, #tpu.memory_space<vmem>>, %arg13: memref<2x8x384xf32, #tpu.memory_space<vmem>>, %arg14: memref<8x1xf32, #tpu.memory_space<vmem>>, %arg15: memref<2x!tpu.dma_semaphore, #tpu.memory_space<semaphore_mem>>) attributes {dimension_semantics = [#tpu.dimension_semantics<parallel>, #tpu.dimension_semantics<arbitrary>], iteration_bounds = array<i64: 2, 1>, scalar_prefetch = 0 : i64, scratch_operands = 3 : i64, tpu.core_type = #tpu.core_type<tc>, window_params = [{}, {pipeline_mode = #tpu.pipeline_mode<synchronous>, transform_indices = @transform_1, window_bounds = array<i64: 1, 384>}, {pipeline_mode = #tpu.pipeline_mode<synchronous>, transform_indices = @transform_2, window_bounds = array<i64: 8, 72>}, {pipeline_mode = #tpu.pipeline_mode<synchronous>, transform_indices = @transform_3, window_bounds = array<i64: 8, 1>}, {pipeline_mode = #tpu.pipeline_mode<synchronous>, transform_indices = @transform_4, window_bounds = array<i64: 3, 72>}, {pipeline_mode = #tpu.pipeline_mode<synchronous>, transform_indices = @transform_5, window_bounds = array<i64: 3, 1>}, {pipeline_mode = #tpu.pipeline_mode<synchronous>, transform_indices = @transform_6, window_bounds = array<i64: 8, 72>}, {pipeline_mode = #tpu.pipeline_mode<synchronous>, transform_indices = @transform_7, window_bounds = array<i64: 8, 1>}, {pipeline_mode = #tpu.pipeline_mode<synchronous>, transform_indices = @transform_8, window_bounds = array<i64: 8, 5>}, {pipeline_mode = #tpu.pipeline_mode<synchronous>, transform_indices = @transform_9, window_bounds = array<i64: 1, 5>}, {transform_indices = @transform_10, window_bounds = array<i64: 1, 1, 5>}]} {
    %c2_i32 = arith.constant 2 : i32
    %c0_i32 = arith.constant 0 : i32
    %0 = arith.cmpi eq, %c2_i32, %c0_i32 : i32
    %c1_i32 = arith.constant 1 : i32
    %1 = arith.select %0, %c1_i32, %c2_i32 : i32
    %2 = arith.remsi %arg1, %1 : i32
    %c0_i32_0 = arith.constant 0 : i32
    %3 = arith.cmpi ne, %2, %c0_i32_0 : i32
    %c0_i32_1 = arith.constant 0 : i32
    %4 = arith.cmpi slt, %2, %c0_i32_1 : i32
    %c0_i32_2 = arith.constant 0 : i32
    %5 = arith.cmpi slt, %1, %c0_i32_2 : i32
    %6 = arith.xori %4, %5 : i1
    %7 = arith.andi %6, %3 : i1
    %8 = arith.addi %2, %1 : i32
    %9 = arith.select %7, %8, %2 : i32
    %c0_i32_3 = arith.constant 0 : i32
    %10 = arith.cmpi eq, %arg1, %c0_i32_3 : i32
    %11 = arith.extui %10 : i1 to i32
    %c0_i32_4 = arith.constant 0 : i32
    %12 = arith.cmpi ne, %11, %c0_i32_4 : i32
    scf.if %12 {
      %c0_i32_88 = arith.constant 0 : i32
      %c0_i32_89 = arith.constant 0 : i32
      %c0_i32_90 = arith.constant 0 : i32
      %c0_i32_91 = arith.constant 0 : i32
      %203 = tpu.memref_slice %arg2[%arg0, %c0_i32_90, %c0_i32_91] : memref<2x8x384xf32, #tpu.memory_space<any>> -> memref<1x8x384xf32, #tpu.memory_space<any>>
      %204 = tpu.memref_squeeze %203 : memref<1x8x384xf32, #tpu.memory_space<any>> -> memref<8x384xf32, #tpu.memory_space<any>>
      %c0_i32_92 = arith.constant 0 : i32
      %c0_i32_93 = arith.constant 0 : i32
      %205 = tpu.memref_slice %arg13[%c0_i32_88, %c0_i32_92, %c0_i32_93] : memref<2x8x384xf32, #tpu.memory_space<vmem>> -> memref<1x8x384xf32, #tpu.memory_space<vmem>>
      %206 = tpu.memref_squeeze %205 : memref<1x8x384xf32, #tpu.memory_space<vmem>> -> memref<8x384xf32, #tpu.memory_space<vmem>>
      %207 = tpu.memref_slice %arg15[%c0_i32_89] : memref<2x!tpu.dma_semaphore, #tpu.memory_space<semaphore_mem>> -> memref<1x!tpu.dma_semaphore, #tpu.memory_space<semaphore_mem>>
      %208 = tpu.memref_squeeze %207 : memref<1x!tpu.dma_semaphore, #tpu.memory_space<semaphore_mem>> -> memref<!tpu.dma_semaphore, #tpu.memory_space<semaphore_mem>>
      tpu.enqueue_dma source(%204 : memref<8x384xf32, #tpu.memory_space<any>>) target(%206 : memref<8x384xf32, #tpu.memory_space<vmem>>) target_semaphore(%208 : memref<!tpu.dma_semaphore, #tpu.memory_space<semaphore_mem>>)
    } else {
    }
    %c1_i32_5 = arith.constant 1 : i32
    %13 = arith.addi %arg1, %c1_i32_5 : i32
    %c1_i32_6 = arith.constant 1 : i32
    %14 = arith.cmpi slt, %13, %c1_i32_6 : i32
    %15 = arith.extui %14 : i1 to i32
    %c0_i32_7 = arith.constant 0 : i32
    %16 = arith.cmpi ne, %15, %c0_i32_7 : i32
    scf.if %16 {
      %c1_i32_88 = arith.constant 1 : i32
      %203 = arith.addi %arg1, %c1_i32_88 : i32
      %c1_i32_89 = arith.constant 1 : i32
      %204 = arith.subi %c1_i32_89, %9 : i32
      %c256_i32_90 = arith.constant 256 : i32
      %205 = arith.muli %203, %c256_i32_90 : i32
      %c0_i32_91 = arith.constant 0 : i32
      %206 = tpu.memref_slice %arg2[%arg0, %c0_i32_91, %205] : memref<2x8x384xf32, #tpu.memory_space<any>> -> memref<1x8x384xf32, #tpu.memory_space<any>>
      %207 = tpu.memref_squeeze %206 : memref<1x8x384xf32, #tpu.memory_space<any>> -> memref<8x384xf32, #tpu.memory_space<any>>
      %c0_i32_92 = arith.constant 0 : i32
      %c0_i32_93 = arith.constant 0 : i32
      %208 = tpu.memref_slice %arg13[%204, %c0_i32_92, %c0_i32_93] : memref<2x8x384xf32, #tpu.memory_space<vmem>> -> memref<1x8x384xf32, #tpu.memory_space<vmem>>
      %209 = tpu.memref_squeeze %208 : memref<1x8x384xf32, #tpu.memory_space<vmem>> -> memref<8x384xf32, #tpu.memory_space<vmem>>
      %210 = tpu.memref_slice %arg15[%204] : memref<2x!tpu.dma_semaphore, #tpu.memory_space<semaphore_mem>> -> memref<1x!tpu.dma_semaphore, #tpu.memory_space<semaphore_mem>>
      %211 = tpu.memref_squeeze %210 : memref<1x!tpu.dma_semaphore, #tpu.memory_space<semaphore_mem>> -> memref<!tpu.dma_semaphore, #tpu.memory_space<semaphore_mem>>
      tpu.enqueue_dma source(%207 : memref<8x384xf32, #tpu.memory_space<any>>) target(%209 : memref<8x384xf32, #tpu.memory_space<vmem>>) target_semaphore(%211 : memref<!tpu.dma_semaphore, #tpu.memory_space<semaphore_mem>>)
    } else {
    }
    %c256_i32 = arith.constant 256 : i32
    %17 = arith.muli %arg1, %c256_i32 : i32
    %c0_i32_8 = arith.constant 0 : i32
    %18 = tpu.memref_slice %arg2[%arg0, %c0_i32_8, %17] : memref<2x8x384xf32, #tpu.memory_space<any>> -> memref<1x8x384xf32, #tpu.memory_space<any>>
    %19 = tpu.memref_squeeze %18 : memref<1x8x384xf32, #tpu.memory_space<any>> -> memref<8x384xf32, #tpu.memory_space<any>>
    %c0_i32_9 = arith.constant 0 : i32
    %c0_i32_10 = arith.constant 0 : i32
    %20 = tpu.memref_slice %arg13[%9, %c0_i32_9, %c0_i32_10] : memref<2x8x384xf32, #tpu.memory_space<vmem>> -> memref<1x8x384xf32, #tpu.memory_space<vmem>>
    %21 = tpu.memref_squeeze %20 : memref<1x8x384xf32, #tpu.memory_space<vmem>> -> memref<8x384xf32, #tpu.memory_space<vmem>>
    %22 = tpu.memref_slice %arg15[%9] : memref<2x!tpu.dma_semaphore, #tpu.memory_space<semaphore_mem>> -> memref<1x!tpu.dma_semaphore, #tpu.memory_space<semaphore_mem>>
    %23 = tpu.memref_squeeze %22 : memref<1x!tpu.dma_semaphore, #tpu.memory_space<semaphore_mem>> -> memref<!tpu.dma_semaphore, #tpu.memory_space<semaphore_mem>>
    tpu.wait_dma2 semaphore(%23 : memref<!tpu.dma_semaphore, #tpu.memory_space<semaphore_mem>>) src(%19 : memref<8x384xf32, #tpu.memory_space<any>>) dst(%21 : memref<8x384xf32, #tpu.memory_space<vmem>>)
    %24 = arith.index_cast %9 : i32 to index
    %c0 = arith.constant 0 : index
    %c0_11 = arith.constant 0 : index
    %25 = vector.load %arg13[%24, %c0, %c0_11] : memref<2x8x384xf32, #tpu.memory_space<vmem>>, vector<1x8x384xf32>
    %26 = vector.shape_cast %25 : vector<1x8x384xf32> to vector<8x384xf32>
    %c0_12 = arith.constant 0 : index
    %c0_13 = arith.constant 0 : index
    %27 = vector.load %arg3[%c0_12, %c0_13] : memref<1x384xi32, #tpu.memory_space<vmem>>, vector<1x384xi32>
    %c0_i32_14 = arith.constant 0 : i32
    %28 = vector.broadcast %c0_i32_14 : i32 to vector<1x384xi32>
    %29 = arith.cmpi sgt, %27, %28 : vector<1x384xi32>
    %c15_i32 = arith.constant 15 : i32
    %30 = vector.broadcast %c15_i32 : i32 to vector<1x384xi32>
    %31 = arith.cmpi slt, %27, %30 : vector<1x384xi32>
    %32 = tpu.iota {dimensions = array<i32: 1>} : vector<1x384xi32>
    %c16_i32 = arith.constant 16 : i32
    %33 = arith.muli %arg1, %c16_i32 : i32
    %c17_i32 = arith.constant 17 : i32
    %34 = tpu.dynamic_rotate %26 by %c17_i32 dim 1 : vector<8x384xf32>, i32 -> vector<8x384xf32>
    %cst = arith.constant 0.000000e+00 : f32
    %35 = vector.shape_cast %29 : vector<1x384xi1> to vector<1x384xi1>
    %36 = vector.broadcast %35 : vector<1x384xi1> to vector<8x384xi1>
    %37 = vector.broadcast %cst : f32 to vector<8x384xf32>
    %38 = arith.select %36, %34, %37 : vector<8x384xi1>, vector<8x384xf32>
    %c16_i32_15 = arith.constant 16 : i32
    %39 = tpu.dynamic_rotate %26 by %c16_i32_15 dim 1 : vector<8x384xf32>, i32 -> vector<8x384xf32>
    %c15_i32_16 = arith.constant 15 : i32
    %40 = tpu.dynamic_rotate %26 by %c15_i32_16 dim 1 : vector<8x384xf32>, i32 -> vector<8x384xf32>
    %cst_17 = arith.constant 0.000000e+00 : f32
    %41 = vector.shape_cast %31 : vector<1x384xi1> to vector<1x384xi1>
    %42 = vector.broadcast %41 : vector<1x384xi1> to vector<8x384xi1>
    %43 = vector.broadcast %cst_17 : f32 to vector<8x384xf32>
    %44 = arith.select %42, %40, %43 : vector<8x384xi1>, vector<8x384xf32>
    %c1_i32_18 = arith.constant 1 : i32
    %45 = tpu.dynamic_rotate %26 by %c1_i32_18 dim 1 : vector<8x384xf32>, i32 -> vector<8x384xf32>
    %cst_19 = arith.constant 0.000000e+00 : f32
    %46 = vector.shape_cast %29 : vector<1x384xi1> to vector<1x384xi1>
    %47 = vector.broadcast %46 : vector<1x384xi1> to vector<8x384xi1>
    %48 = vector.broadcast %cst_19 : f32 to vector<8x384xf32>
    %49 = arith.select %47, %45, %48 : vector<8x384xi1>, vector<8x384xf32>
    %c383_i32 = arith.constant 383 : i32
    %50 = tpu.dynamic_rotate %26 by %c383_i32 dim 1 : vector<8x384xf32>, i32 -> vector<8x384xf32>
    %cst_20 = arith.constant 0.000000e+00 : f32
    %51 = vector.shape_cast %31 : vector<1x384xi1> to vector<1x384xi1>
    %52 = vector.broadcast %51 : vector<1x384xi1> to vector<8x384xi1>
    %53 = vector.broadcast %cst_20 : f32 to vector<8x384xf32>
    %54 = arith.select %52, %50, %53 : vector<8x384xi1>, vector<8x384xf32>
    %c369_i32 = arith.constant 369 : i32
    %55 = tpu.dynamic_rotate %26 by %c369_i32 dim 1 : vector<8x384xf32>, i32 -> vector<8x384xf32>
    %cst_21 = arith.constant 0.000000e+00 : f32
    %56 = vector.shape_cast %29 : vector<1x384xi1> to vector<1x384xi1>
    %57 = vector.broadcast %56 : vector<1x384xi1> to vector<8x384xi1>
    %58 = vector.broadcast %cst_21 : f32 to vector<8x384xf32>
    %59 = arith.select %57, %55, %58 : vector<8x384xi1>, vector<8x384xf32>
    %c368_i32 = arith.constant 368 : i32
    %60 = tpu.dynamic_rotate %26 by %c368_i32 dim 1 : vector<8x384xf32>, i32 -> vector<8x384xf32>
    %c367_i32 = arith.constant 367 : i32
    %61 = tpu.dynamic_rotate %26 by %c367_i32 dim 1 : vector<8x384xf32>, i32 -> vector<8x384xf32>
    %cst_22 = arith.constant 0.000000e+00 : f32
    %62 = vector.shape_cast %31 : vector<1x384xi1> to vector<1x384xi1>
    %63 = vector.broadcast %62 : vector<1x384xi1> to vector<8x384xi1>
    %64 = vector.broadcast %cst_22 : f32 to vector<8x384xf32>
    %65 = arith.select %63, %61, %64 : vector<8x384xi1>, vector<8x384xf32>
    %66 = tpu.concatenate %38, %39, %44, %49, %26, %54, %59, %60, %65 in 0 : vector<8x384xf32>, vector<8x384xf32>, vector<8x384xf32>, vector<8x384xf32>, vector<8x384xf32>, vector<8x384xf32>, vector<8x384xf32>, vector<8x384xf32>, vector<8x384xf32> -> vector<72x384xf32>
    %67 = arith.truncf %66 : vector<72x384xf32> to vector<72x384xbf16>
    %c0_23 = arith.constant 0 : index
    %c0_24 = arith.constant 0 : index
    %68 = vector.load %arg4[%c0_23, %c0_24] : memref<8x72xbf16, #tpu.memory_space<vmem>>, vector<8x72xbf16>
    %cst_25 = arith.constant dense<0.000000e+00> : vector<8x384xf32>
    %69 = tpu.matmul %68, %67, %cst_25 {dimension_numbers = #tpu.dot_dimension_numbers<[1], [0], [0], [1], [0, 0, 1, 1], [], []>} : vector<8x72xbf16>, vector<72x384xbf16>, vector<8x384xf32> -> vector<8x384xf32>
    %c0_26 = arith.constant 0 : index
    %c0_27 = arith.constant 0 : index
    %70 = vector.load %arg5[%c0_26, %c0_27] : memref<8x1xf32, #tpu.memory_space<vmem>>, vector<8x1xf32>
    %71 = vector.broadcast %70 : vector<8x1xf32> to vector<8x384xf32>
    %72 = arith.addf %69, %71 : vector<8x384xf32>
    %cst_28 = arith.constant 0.000000e+00 : f32
    %73 = vector.broadcast %cst_28 : f32 to vector<8x384xf32>
    %74 = arith.maximumf %72, %73 : vector<8x384xf32>
    %c3_i32 = arith.constant 3 : i32
    %75 = arith.subi %c3_i32, %33 : i32
    %c16_i32_29 = arith.constant 16 : i32
    %76 = arith.muli %75, %c16_i32_29 : i32
    %77 = vector.broadcast %76 : i32 to vector<1x384xi32>
    %78 = arith.cmpi sge, %32, %77 : vector<1x384xi32>
    %c19_i32 = arith.constant 19 : i32
    %79 = arith.subi %c19_i32, %33 : i32
    %c16_i32_30 = arith.constant 16 : i32
    %80 = arith.muli %79, %c16_i32_30 : i32
    %81 = vector.broadcast %80 : i32 to vector<1x384xi32>
    %82 = arith.cmpi slt, %32, %81 : vector<1x384xi32>
    %83 = arith.andi %78, %82 : vector<1x384xi1>
    %cst_31 = arith.constant 0.000000e+00 : f32
    %84 = vector.shape_cast %83 : vector<1x384xi1> to vector<1x384xi1>
    %85 = vector.broadcast %84 : vector<1x384xi1> to vector<8x384xi1>
    %86 = vector.broadcast %cst_31 : f32 to vector<8x384xf32>
    %87 = arith.select %85, %74, %86 : vector<8x384xi1>, vector<8x384xf32>
    %c17_i32_32 = arith.constant 17 : i32
    %88 = tpu.dynamic_rotate %87 by %c17_i32_32 dim 1 : vector<8x384xf32>, i32 -> vector<8x384xf32>
    %cst_33 = arith.constant 0.000000e+00 : f32
    %89 = vector.shape_cast %29 : vector<1x384xi1> to vector<1x384xi1>
    %90 = vector.broadcast %89 : vector<1x384xi1> to vector<8x384xi1>
    %91 = vector.broadcast %cst_33 : f32 to vector<8x384xf32>
    %92 = arith.select %90, %88, %91 : vector<8x384xi1>, vector<8x384xf32>
    %c16_i32_34 = arith.constant 16 : i32
    %93 = tpu.dynamic_rotate %87 by %c16_i32_34 dim 1 : vector<8x384xf32>, i32 -> vector<8x384xf32>
    %c15_i32_35 = arith.constant 15 : i32
    %94 = tpu.dynamic_rotate %87 by %c15_i32_35 dim 1 : vector<8x384xf32>, i32 -> vector<8x384xf32>
    %cst_36 = arith.constant 0.000000e+00 : f32
    %95 = vector.shape_cast %31 : vector<1x384xi1> to vector<1x384xi1>
    %96 = vector.broadcast %95 : vector<1x384xi1> to vector<8x384xi1>
    %97 = vector.broadcast %cst_36 : f32 to vector<8x384xf32>
    %98 = arith.select %96, %94, %97 : vector<8x384xi1>, vector<8x384xf32>
    %c1_i32_37 = arith.constant 1 : i32
    %99 = tpu.dynamic_rotate %87 by %c1_i32_37 dim 1 : vector<8x384xf32>, i32 -> vector<8x384xf32>
    %cst_38 = arith.constant 0.000000e+00 : f32
    %100 = vector.shape_cast %29 : vector<1x384xi1> to vector<1x384xi1>
    %101 = vector.broadcast %100 : vector<1x384xi1> to vector<8x384xi1>
    %102 = vector.broadcast %cst_38 : f32 to vector<8x384xf32>
    %103 = arith.select %101, %99, %102 : vector<8x384xi1>, vector<8x384xf32>
    %c383_i32_39 = arith.constant 383 : i32
    %104 = tpu.dynamic_rotate %87 by %c383_i32_39 dim 1 : vector<8x384xf32>, i32 -> vector<8x384xf32>
    %cst_40 = arith.constant 0.000000e+00 : f32
    %105 = vector.shape_cast %31 : vector<1x384xi1> to vector<1x384xi1>
    %106 = vector.broadcast %105 : vector<1x384xi1> to vector<8x384xi1>
    %107 = vector.broadcast %cst_40 : f32 to vector<8x384xf32>
    %108 = arith.select %106, %104, %107 : vector<8x384xi1>, vector<8x384xf32>
    %c369_i32_41 = arith.constant 369 : i32
    %109 = tpu.dynamic_rotate %87 by %c369_i32_41 dim 1 : vector<8x384xf32>, i32 -> vector<8x384xf32>
    %cst_42 = arith.constant 0.000000e+00 : f32
    %110 = vector.shape_cast %29 : vector<1x384xi1> to vector<1x384xi1>
    %111 = vector.broadcast %110 : vector<1x384xi1> to vector<8x384xi1>
    %112 = vector.broadcast %cst_42 : f32 to vector<8x384xf32>
    %113 = arith.select %111, %109, %112 : vector<8x384xi1>, vector<8x384xf32>
    %c368_i32_43 = arith.constant 368 : i32
    %114 = tpu.dynamic_rotate %87 by %c368_i32_43 dim 1 : vector<8x384xf32>, i32 -> vector<8x384xf32>
    %c367_i32_44 = arith.constant 367 : i32
    %115 = tpu.dynamic_rotate %87 by %c367_i32_44 dim 1 : vector<8x384xf32>, i32 -> vector<8x384xf32>
    %cst_45 = arith.constant 0.000000e+00 : f32
    %116 = vector.shape_cast %31 : vector<1x384xi1> to vector<1x384xi1>
    %117 = vector.broadcast %116 : vector<1x384xi1> to vector<8x384xi1>
    %118 = vector.broadcast %cst_45 : f32 to vector<8x384xf32>
    %119 = arith.select %117, %115, %118 : vector<8x384xi1>, vector<8x384xf32>
    %120 = tpu.concatenate %92, %93, %98, %103, %87, %108, %113, %114, %119 in 0 : vector<8x384xf32>, vector<8x384xf32>, vector<8x384xf32>, vector<8x384xf32>, vector<8x384xf32>, vector<8x384xf32>, vector<8x384xf32>, vector<8x384xf32>, vector<8x384xf32> -> vector<72x384xf32>
    %c0_46 = arith.constant 0 : index
    %c0_47 = arith.constant 0 : index
    %121 = vector.load %arg6[%c0_46, %c0_47] : memref<3x72xf32, #tpu.memory_space<vmem>>, vector<3x72xf32>
    %cst_48 = arith.constant dense<0.000000e+00> : vector<3x384xf32>
    %122 = tpu.matmul %121, %120, %cst_48 {dimension_numbers = #tpu.dot_dimension_numbers<[1], [0], [0], [1], [0, 0, 1, 1], [], []>} : vector<3x72xf32>, vector<72x384xf32>, vector<3x384xf32> -> vector<3x384xf32>
    %c0_49 = arith.constant 0 : index
    %c0_50 = arith.constant 0 : index
    %123 = vector.load %arg7[%c0_49, %c0_50] : memref<3x1xf32, #tpu.memory_space<vmem>>, vector<3x1xf32>
    %124 = vector.broadcast %123 : vector<3x1xf32> to vector<3x384xf32>
    %125 = arith.addf %122, %124 : vector<3x384xf32>
    %cst_51 = arith.constant dense<0xFF800000> : vector<384xf32>
    %126 = vector.multi_reduction <maximumf>, %125, %cst_51 [0] : vector<3x384xf32> to vector<384xf32>
    %127 = vector.shape_cast %126 : vector<384xf32> to vector<1x384xf32>
    %128 = vector.broadcast %127 : vector<1x384xf32> to vector<3x384xf32>
    %129 = arith.subf %125, %128 : vector<3x384xf32>
    %130 = math.exp %129 : vector<3x384xf32>
    %cst_52 = arith.constant dense<0.000000e+00> : vector<384xf32>
    %131 = vector.multi_reduction <add>, %130, %cst_52 [0] : vector<3x384xf32> to vector<384xf32>
    %132 = vector.shape_cast %131 : vector<384xf32> to vector<1x384xf32>
    %133 = tpu.reciprocal %132 {approx = true} : vector<1x384xf32> -> vector<1x384xf32>
    %cst_53 = arith.constant 1.000000e+00 : f32
    %134 = vector.broadcast %cst_53 : f32 to vector<1x384xf32>
    %135 = arith.addf %133, %134 : vector<1x384xf32>
    %136 = vector.broadcast %135 : vector<1x384xf32> to vector<8x384xf32>
    %137 = arith.mulf %136, %26 : vector<8x384xf32>
    %c17_i32_54 = arith.constant 17 : i32
    %138 = tpu.dynamic_rotate %137 by %c17_i32_54 dim 1 : vector<8x384xf32>, i32 -> vector<8x384xf32>
    %cst_55 = arith.constant 0.000000e+00 : f32
    %139 = vector.shape_cast %29 : vector<1x384xi1> to vector<1x384xi1>
    %140 = vector.broadcast %139 : vector<1x384xi1> to vector<8x384xi1>
    %141 = vector.broadcast %cst_55 : f32 to vector<8x384xf32>
    %142 = arith.select %140, %138, %141 : vector<8x384xi1>, vector<8x384xf32>
    %c16_i32_56 = arith.constant 16 : i32
    %143 = tpu.dynamic_rotate %137 by %c16_i32_56 dim 1 : vector<8x384xf32>, i32 -> vector<8x384xf32>
    %c15_i32_57 = arith.constant 15 : i32
    %144 = tpu.dynamic_rotate %137 by %c15_i32_57 dim 1 : vector<8x384xf32>, i32 -> vector<8x384xf32>
    %cst_58 = arith.constant 0.000000e+00 : f32
    %145 = vector.shape_cast %31 : vector<1x384xi1> to vector<1x384xi1>
    %146 = vector.broadcast %145 : vector<1x384xi1> to vector<8x384xi1>
    %147 = vector.broadcast %cst_58 : f32 to vector<8x384xf32>
    %148 = arith.select %146, %144, %147 : vector<8x384xi1>, vector<8x384xf32>
    %c1_i32_59 = arith.constant 1 : i32
    %149 = tpu.dynamic_rotate %137 by %c1_i32_59 dim 1 : vector<8x384xf32>, i32 -> vector<8x384xf32>
    %cst_60 = arith.constant 0.000000e+00 : f32
    %150 = vector.shape_cast %29 : vector<1x384xi1> to vector<1x384xi1>
    %151 = vector.broadcast %150 : vector<1x384xi1> to vector<8x384xi1>
    %152 = vector.broadcast %cst_60 : f32 to vector<8x384xf32>
    %153 = arith.select %151, %149, %152 : vector<8x384xi1>, vector<8x384xf32>
    %c383_i32_61 = arith.constant 383 : i32
    %154 = tpu.dynamic_rotate %137 by %c383_i32_61 dim 1 : vector<8x384xf32>, i32 -> vector<8x384xf32>
    %cst_62 = arith.constant 0.000000e+00 : f32
    %155 = vector.shape_cast %31 : vector<1x384xi1> to vector<1x384xi1>
    %156 = vector.broadcast %155 : vector<1x384xi1> to vector<8x384xi1>
    %157 = vector.broadcast %cst_62 : f32 to vector<8x384xf32>
    %158 = arith.select %156, %154, %157 : vector<8x384xi1>, vector<8x384xf32>
    %c369_i32_63 = arith.constant 369 : i32
    %159 = tpu.dynamic_rotate %137 by %c369_i32_63 dim 1 : vector<8x384xf32>, i32 -> vector<8x384xf32>
    %cst_64 = arith.constant 0.000000e+00 : f32
    %160 = vector.shape_cast %29 : vector<1x384xi1> to vector<1x384xi1>
    %161 = vector.broadcast %160 : vector<1x384xi1> to vector<8x384xi1>
    %162 = vector.broadcast %cst_64 : f32 to vector<8x384xf32>
    %163 = arith.select %161, %159, %162 : vector<8x384xi1>, vector<8x384xf32>
    %c368_i32_65 = arith.constant 368 : i32
    %164 = tpu.dynamic_rotate %137 by %c368_i32_65 dim 1 : vector<8x384xf32>, i32 -> vector<8x384xf32>
    %c367_i32_66 = arith.constant 367 : i32
    %165 = tpu.dynamic_rotate %137 by %c367_i32_66 dim 1 : vector<8x384xf32>, i32 -> vector<8x384xf32>
    %cst_67 = arith.constant 0.000000e+00 : f32
    %166 = vector.shape_cast %31 : vector<1x384xi1> to vector<1x384xi1>
    %167 = vector.broadcast %166 : vector<1x384xi1> to vector<8x384xi1>
    %168 = vector.broadcast %cst_67 : f32 to vector<8x384xf32>
    %169 = arith.select %167, %165, %168 : vector<8x384xi1>, vector<8x384xf32>
    %170 = tpu.concatenate %142, %143, %148, %153, %137, %158, %163, %164, %169 in 0 : vector<8x384xf32>, vector<8x384xf32>, vector<8x384xf32>, vector<8x384xf32>, vector<8x384xf32>, vector<8x384xf32>, vector<8x384xf32>, vector<8x384xf32>, vector<8x384xf32> -> vector<72x384xf32>
    %171 = arith.truncf %170 : vector<72x384xf32> to vector<72x384xbf16>
    %c0_68 = arith.constant 0 : index
    %c0_69 = arith.constant 0 : index
    %172 = vector.load %arg8[%c0_68, %c0_69] : memref<8x72xbf16, #tpu.memory_space<vmem>>, vector<8x72xbf16>
    %cst_70 = arith.constant dense<0.000000e+00> : vector<8x384xf32>
    %173 = tpu.matmul %172, %171, %cst_70 {dimension_numbers = #tpu.dot_dimension_numbers<[1], [0], [0], [1], [0, 0, 1, 1], [], []>} : vector<8x72xbf16>, vector<72x384xbf16>, vector<8x384xf32> -> vector<8x384xf32>
    %c0_71 = arith.constant 0 : index
    %c0_72 = arith.constant 0 : index
    %174 = vector.load %arg9[%c0_71, %c0_72] : memref<8x1xf32, #tpu.memory_space<vmem>>, vector<8x1xf32>
    %175 = vector.broadcast %174 : vector<8x1xf32> to vector<8x384xf32>
    %176 = arith.addf %173, %175 : vector<8x384xf32>
    %cst_73 = arith.constant 0.000000e+00 : f32
    %177 = vector.broadcast %cst_73 : f32 to vector<8x384xf32>
    %178 = arith.maximumf %176, %177 : vector<8x384xf32>
    %c16_i32_74 = arith.constant 16 : i32
    %179 = arith.subi %c16_i32_74, %33 : i32
    %c16_i32_75 = arith.constant 16 : i32
    %180 = arith.minsi %c16_i32_75, %179 : i32
    %c48_i32 = arith.constant 48 : i32
    %181 = vector.broadcast %c48_i32 : i32 to vector<1x384xi32>
    %182 = arith.cmpi sge, %32, %181 : vector<1x384xi32>
    %c3_i32_76 = arith.constant 3 : i32
    %183 = arith.addi %c3_i32_76, %180 : i32
    %c16_i32_77 = arith.constant 16 : i32
    %184 = arith.muli %183, %c16_i32_77 : i32
    %185 = vector.broadcast %184 : i32 to vector<1x384xi32>
    %186 = arith.cmpi slt, %32, %185 : vector<1x384xi32>
    %187 = arith.andi %182, %186 : vector<1x384xi1>
    %cst_78 = arith.constant 0.000000e+00 : f32
    %188 = vector.shape_cast %187 : vector<1x384xi1> to vector<1x384xi1>
    %189 = vector.broadcast %188 : vector<1x384xi1> to vector<8x384xi1>
    %190 = vector.broadcast %cst_78 : f32 to vector<8x384xf32>
    %191 = arith.select %189, %178, %190 : vector<8x384xi1>, vector<8x384xf32>
    %cst_79 = arith.constant dense<0.000000e+00> : vector<8xf32>
    %192 = vector.multi_reduction <add>, %191, %cst_79 [1] : vector<8x384xf32> to vector<8xf32>
    %193 = vector.shape_cast %192 : vector<8xf32> to vector<8x1xf32>
    %c0_i32_80 = arith.constant 0 : i32
    %194 = arith.cmpi eq, %arg1, %c0_i32_80 : i32
    %195 = arith.extui %194 : i1 to i32
    %c0_i32_81 = arith.constant 0 : i32
    %196 = arith.cmpi ne, %195, %c0_i32_81 : i32
    scf.if %196 {
      %cst_88 = arith.constant 0.000000e+00 : f32
      %203 = vector.broadcast %cst_88 : f32 to vector<8x1xf32>
      %c0_89 = arith.constant 0 : index
      %c0_90 = arith.constant 0 : index
      %204 = vector.load %arg14[%c0_89, %c0_90] : memref<8x1xf32, #tpu.memory_space<vmem>>, vector<8x1xf32>
      tpu.vector_store %arg14[%c0_89, %c0_90], %203 {strides = array<i32>} : memref<8x1xf32, #tpu.memory_space<vmem>>, vector<8x1xf32>,
    } else {
    }
    %c0_82 = arith.constant 0 : index
    %c0_83 = arith.constant 0 : index
    %197 = vector.load %arg14[%c0_82, %c0_83] : memref<8x1xf32, #tpu.memory_space<vmem>>, vector<8x1xf32>
    %198 = arith.addf %197, %193 : vector<8x1xf32>
    %c0_84 = arith.constant 0 : index
    %c0_85 = arith.constant 0 : index
    %199 = vector.load %arg14[%c0_84, %c0_85] : memref<8x1xf32, #tpu.memory_space<vmem>>, vector<8x1xf32>
    tpu.vector_store %arg14[%c0_84, %c0_85], %198 {strides = array<i32>} : memref<8x1xf32, #tpu.memory_space<vmem>>, vector<8x1xf32>,
    %c0_i32_86 = arith.constant 0 : i32
    %200 = arith.cmpi eq, %arg1, %c0_i32_86 : i32
    %201 = arith.extui %200 : i1 to i32
    %c0_i32_87 = arith.constant 0 : i32
    %202 = arith.cmpi ne, %201, %c0_i32_87 : i32
    scf.if %202 {
      %c0_88 = arith.constant 0 : index
      %c0_89 = arith.constant 0 : index
      %203 = vector.load %arg14[%c0_88, %c0_89] : memref<8x1xf32, #tpu.memory_space<vmem>>, vector<8x1xf32>
      %cst_90 = arith.constant 3.906250e-03 : f32
      %204 = vector.broadcast %cst_90 : f32 to vector<8x1xf32>
      %205 = arith.mulf %203, %204 : vector<8x1xf32>
      %c0_91 = arith.constant 0 : index
      %c0_92 = arith.constant 0 : index
      %206 = vector.load %arg10[%c0_91, %c0_92] : memref<8x5xf32, #tpu.memory_space<vmem>>, vector<8x5xf32>
      %207 = vector.broadcast %205 : vector<8x1xf32> to vector<8x5xf32>
      %208 = arith.mulf %206, %207 : vector<8x5xf32>
      %cst_93 = arith.constant dense<0.000000e+00> : vector<5xf32>
      %209 = vector.multi_reduction <add>, %208, %cst_93 [0] : vector<8x5xf32> to vector<5xf32>
      %210 = vector.shape_cast %209 : vector<5xf32> to vector<1x5xf32>
      %c0_94 = arith.constant 0 : index
      %c0_95 = arith.constant 0 : index
      %211 = vector.load %arg11[%c0_94, %c0_95] : memref<1x5xf32, #tpu.memory_space<vmem>>, vector<1x5xf32>
      %212 = arith.addf %210, %211 : vector<1x5xf32>
      %c0_96 = arith.constant 0 : index
      %c0_97 = arith.constant 0 : index
      %c0_98 = arith.constant 0 : index
      %213 = vector.load %arg12[%c0_96, %c0_97, %c0_98] : memref<1x1x5xf32, #tpu.memory_space<vmem>>, vector<1x1x5xf32>
      %214 = vector.shape_cast %213 : vector<1x1x5xf32> to vector<1x5xf32>
      %215 = vector.shape_cast %212 : vector<1x5xf32> to vector<1x1x5xf32>
      tpu.vector_store %arg12[%c0_96, %c0_97, %c0_98], %215 {strides = array<i32>} : memref<1x1x5xf32, #tpu.memory_space<vmem>>, vector<1x1x5xf32>,
    } else {
    }
    return
  }
  func.func @transform_1(%arg0: i32, %arg1: i32) -> (i32, i32) {
    %c0_i32 = arith.constant 0 : i32
    %c0_i32_0 = arith.constant 0 : i32
    %c0_i32_1 = arith.constant 0 : i32
    return %c0_i32, %c0_i32_0 : i32, i32
  }
  func.func @transform_2(%arg0: i32, %arg1: i32) -> (i32, i32) {
    %c0_i32 = arith.constant 0 : i32
    %c0_i32_0 = arith.constant 0 : i32
    %c0_i32_1 = arith.constant 0 : i32
    return %c0_i32, %c0_i32_0 : i32, i32
  }
  func.func @transform_3(%arg0: i32, %arg1: i32) -> (i32, i32) {
    %c0_i32 = arith.constant 0 : i32
    %c0_i32_0 = arith.constant 0 : i32
    %c0_i32_1 = arith.constant 0 : i32
    return %c0_i32, %c0_i32_0 : i32, i32
  }
  func.func @transform_4(%arg0: i32, %arg1: i32) -> (i32, i32) {
    %c0_i32 = arith.constant 0 : i32
    %c0_i32_0 = arith.constant 0 : i32
    %c0_i32_1 = arith.constant 0 : i32
    return %c0_i32, %c0_i32_0 : i32, i32
  }
  func.func @transform_5(%arg0: i32, %arg1: i32) -> (i32, i32) {
    %c0_i32 = arith.constant 0 : i32
    %c0_i32_0 = arith.constant 0 : i32
    %c0_i32_1 = arith.constant 0 : i32
    return %c0_i32, %c0_i32_0 : i32, i32
  }
  func.func @transform_6(%arg0: i32, %arg1: i32) -> (i32, i32) {
    %c0_i32 = arith.constant 0 : i32
    %c0_i32_0 = arith.constant 0 : i32
    %c0_i32_1 = arith.constant 0 : i32
    return %c0_i32, %c0_i32_0 : i32, i32
  }
  func.func @transform_7(%arg0: i32, %arg1: i32) -> (i32, i32) {
    %c0_i32 = arith.constant 0 : i32
    %c0_i32_0 = arith.constant 0 : i32
    %c0_i32_1 = arith.constant 0 : i32
    return %c0_i32, %c0_i32_0 : i32, i32
  }
  func.func @transform_8(%arg0: i32, %arg1: i32) -> (i32, i32) {
    %c0_i32 = arith.constant 0 : i32
    %c0_i32_0 = arith.constant 0 : i32
    %c0_i32_1 = arith.constant 0 : i32
    return %c0_i32, %c0_i32_0 : i32, i32
  }
  func.func @transform_9(%arg0: i32, %arg1: i32) -> (i32, i32) {
    %c0_i32 = arith.constant 0 : i32
    %c0_i32_0 = arith.constant 0 : i32
    %c0_i32_1 = arith.constant 0 : i32
    return %c0_i32, %c0_i32_0 : i32, i32
  }
  func.func @transform_10(%arg0: i32, %arg1: i32) -> (i32, i32, i32) {
    %c0_i32 = arith.constant 0 : i32
    %c0_i32_0 = arith.constant 0 : i32
    %c0_i32_1 = arith.constant 0 : i32
    return %arg0, %c0_i32, %c0_i32_0 : i32, i32, i32
  }
}

</mosaic_0001>

<llo_original>
// kernel: combined_forward.1
$region0: #{combined_forward.1}
  #allocation0 [shape = 'u32[]', space=smem, size = 0x4, offset = 0x4, fixed_abs, tag = 'smem constant byte address 0x4 - core index']
  #allocation1 [shape = 'u32[72,128]{1,0:T(1,128)}', space=vmem, size = 0x9000, scoped, tag = 'internal scratch']
  #allocation2 [shape = 'f32[2,8,384]{2,1,0:T(8,128)}', space=vmem, size = 0x6000, scoped, tag = 'scratch operand']
  #allocation3 [shape = 'f32[8,1]{1,0:T(8,128)}', space=vmem, size = 0x1000, scoped, tag = 'scratch operand']
  #allocation4 [shape = 's32[2]{0}', space=sflag, size = 0x8, scoped, tag = 'scratch operand']
  #allocation7 [shape = 's32[]', space=sflag, size = 0x4, offset = 0, fixed_abs, tag = 'sflag constant byte address 0x0 - dummy sync flag']
  #allocation8 [shape = 's32[]', space=sflag, size = 0x4, offset = 0, fixed_abs, tag = 'sflag constant byte address 0x0 - dummy sync flag']
  %s0 = inlined_call_operand.vmem [shape: f32[2,8,384], index: 0, kind: input, shape index: {}]
  %s1 = inlined_call_operand.vmem [shape: s32[1,384], index: 1, kind: input, shape index: {}]
  %s2 = inlined_call_operand.vmem [shape: bf16[8,72], index: 2, kind: input, shape index: {}]
  %s3 = inlined_call_operand.vmem [shape: f32[8,1], index: 3, kind: input, shape index: {}]
  %s4 = inlined_call_operand.vmem [shape: f32[3,72], index: 4, kind: input, shape index: {}]
  %s5 = inlined_call_operand.vmem [shape: f32[3,1], index: 5, kind: input, shape index: {}]
  %s6 = inlined_call_operand.vmem [shape: bf16[8,72], index: 6, kind: input, shape index: {}]
  %s7 = inlined_call_operand.vmem [shape: f32[8,1], index: 7, kind: input, shape index: {}]
  %s8 = inlined_call_operand.vmem [shape: f32[8,5], index: 8, kind: input, shape index: {}]
  %s9 = inlined_call_operand.vmem [shape: f32[1,5], index: 9, kind: input, shape index: {}]
  %s10 = inlined_call_operand.hbm [shape: f32[2,1,5], index: 10, kind: output, shape index: {}]
  %s11 = sld [smem:[#allocation0]]
  $region123: #{combined_forward.1} parent=0
    _
  %s13 = ssub.s32 1, %s11
  %s14 = scalar_select 0, %s13, %s11
  $region1: #{combined_forward.1} parent=0
    #allocation5 [shape = 'u8[1024]{0}', space=vmem, size = 0x400, scoped, tag = 'output window, operand 0']
    #allocation6 [shape = 's32[2]{0}', space=sflag, size = 0x8, scoped, tag = 'scoped memory for combined_forward.1']
    %15 = vsyncpa [#allocation6], 0
    %s16 = scalar_lea.sflag [#allocation6], 1
    %17 = vsyncpa %s16, 0
    loop: start=0, step=1, limit=4
    $region2: #{combined_forward.1} parent=1 // loop_pre_header
      _
    $region3: #{combined_forward.1} parent=1 // loop_header
      %s19 = sphi 0, %s23
      %p20 = scmp.ge.s32.totalorder %s19, 4
      %s26 = sphi 0, %s38
      %s27 = sphi 0, %s34
      %s28 = sphi 0, %s26
      %s29 = sphi 0, %s27
      %s30 = sphi 0, %s28
      %s31 = sphi 0, %s29
      %s39 = sphi 0, %s39
      %s41 = sphi 0, %s39
      %s42 = sphi 0, %s41
      %s56 = sphi 0, %s42
      %s60 = sphi 0, %s60
      %s62 = sphi 0, %s60
      %s63 = sphi 0, %s62
      %s77 = sphi 0, %s63
      %s81 = sphi 0, %s81
      %s83 = sphi 0, %s81
      %s84 = sphi 0, %s83
      %s98 = sphi 0, %s84
      %s102 = sphi 0, %s102
      %s104 = sphi 0, %s102
      %s105 = sphi 0, %s104
      %s119 = sphi 0, %s105
      %s123 = sphi 0, %s123
      %s125 = sphi 0, %s123
      %s126 = sphi 0, %s125
      %s140 = sphi 0, %s126
      %s144 = sphi 0, %s144
      %s146 = sphi 0, %s144
      %s147 = sphi 0, %s146
      %s161 = sphi 0, %s147
      %s165 = sphi 0, %s165
      %s167 = sphi 0, %s165
      %s168 = sphi 0, %s167
      %s182 = sphi 0, %s168
      %s186 = sphi 0, %s186
      %s188 = sphi 0, %s186
      %s189 = sphi 0, %s188
      %s203 = sphi 0, %s189
      %s207 = sphi 0, %s207
      %s209 = sphi 0, %s207
      %s210 = sphi 0, %s209
      %s224 = sphi 0, %s210
      %s230 = sphi 0, %s232
      %s233 = sphi 0, %s230
      %s234 = sphi 0, %s233
      %s250 = sphi 0, %s234
    $region4: #{combined_forward.1} parent=1 // loop_header_branch
      %22 = sbr.rel (%p20) target = $region8
    $region5: #{combined_forward.1} parent=1 // loop_body
      %s24 = ssub.s32 %s19, 1
      %s25 = ssub.s32 %s19, 2
      %s32 = sadd.s32 1, %s27
      %p33 = scmp.ge.s32.totalorder %s32, 1
      %s34 = scalar_select %p33, 0, %s32
      %s35 = sadd.s32 1, %s26
      %s36 = scalar_select %p33, %s35, %s26
      %p37 = scmp.ge.s32.totalorder %s36, 2
      %s38 = scalar_select %p37, 0, %s36
      %s40 = sadd.s32 %s39, 1
      %p43 = scmp.eq.s32.totalorder %s19, 1
      %p44 = scmp.ne.s32.totalorder %s39, %s41
      %p45 = scmp.eq.s32.totalorder %s19, 0
      %p46 = por %p44, %p45
      %p47 = scmp.ne.s32.totalorder %s39, %s41
      %p48 = scmp.eq.s32.totalorder %s24, 1
      %p49 = por %p47, %p48
      %p50 = scmp.ne.s32.totalorder %s41, %s42
      %p51 = scmp.eq.s32.totalorder %s24, 0
      %p52 = por %p50, %p51
      %p53 = scmp.ne.s32.totalorder %s41, %s42
      %p54 = scmp.eq.s32.totalorder %s25, 1
      %p55 = por %p53, %p54
      %p57 = scmp.ne.s32.totalorder %s42, %s56
      %p58 = scmp.eq.s32.totalorder %s25, 0
      %p59 = por %p57, %p58
      %s61 = sadd.s32 %s60, 1
      %p64 = scmp.eq.s32.totalorder %s19, 1
      %p65 = scmp.ne.s32.totalorder %s60, %s62
      %p66 = scmp.eq.s32.totalorder %s19, 0
      %p67 = por %p65, %p66
      %p68 = scmp.ne.s32.totalorder %s60, %s62
      %p69 = scmp.eq.s32.totalorder %s24, 1
      %p70 = por %p68, %p69
      %p71 = scmp.ne.s32.totalorder %s62, %s63
      %p72 = scmp.eq.s32.totalorder %s24, 0
      %p73 = por %p71, %p72
      %p74 = scmp.ne.s32.totalorder %s62, %s63
      %p75 = scmp.eq.s32.totalorder %s25, 1
      %p76 = por %p74, %p75
      %p78 = scmp.ne.s32.totalorder %s63, %s77
      %p79 = scmp.eq.s32.totalorder %s25, 0
      %p80 = por %p78, %p79
      %s82 = sadd.s32 %s81, 1
      %p85 = scmp.eq.s32.totalorder %s19, 1
      %p86 = scmp.ne.s32.totalorder %s81, %s83
      %p87 = scmp.eq.s32.totalorder %s19, 0
      %p88 = por %p86, %p87
      %p89 = scmp.ne.s32.totalorder %s81, %s83
      %p90 = scmp.eq.s32.totalorder %s24, 1
      %p91 = por %p89, %p90
      %p92 = scmp.ne.s32.totalorder %s83, %s84
      %p93 = scmp.eq.s32.totalorder %s24, 0
      %p94 = por %p92, %p93
      %p95 = scmp.ne.s32.totalorder %s83, %s84
      %p96 = scmp.eq.s32.totalorder %s25, 1
      %p97 = por %p95, %p96
      %p99 = scmp.ne.s32.totalorder %s84, %s98
      %p100 = scmp.eq.s32.totalorder %s25, 0
      %p101 = por %p99, %p100
      %s103 = sadd.s32 %s102, 1
      %p106 = scmp.eq.s32.totalorder %s19, 1
      %p107 = scmp.ne.s32.totalorder %s102, %s104
      %p108 = scmp.eq.s32.totalorder %s19, 0
      %p109 = por %p107, %p108
      %p110 = scmp.ne.s32.totalorder %s102, %s104
      %p111 = scmp.eq.s32.totalorder %s24, 1
      %p112 = por %p110, %p111
      %p113 = scmp.ne.s32.totalorder %s104, %s105
      %p114 = scmp.eq.s32.totalorder %s24, 0
      %p115 = por %p113, %p114
      %p116 = scmp.ne.s32.totalorder %s104, %s105
      %p117 = scmp.eq.s32.totalorder %s25, 1
      %p118 = por %p116, %p117
      %p120 = scmp.ne.s32.totalorder %s105, %s119
      %p121 = scmp.eq.s32.totalorder %s25, 0
      %p122 = por %p120, %p121
      %s124 = sadd.s32 %s123, 1
      %p127 = scmp.eq.s32.totalorder %s19, 1
      %p128 = scmp.ne.s32.totalorder %s123, %s125
      %p129 = scmp.eq.s32.totalorder %s19, 0
      %p130 = por %p128, %p129
      %p131 = scmp.ne.s32.totalorder %s123, %s125
      %p132 = scmp.eq.s32.totalorder %s24, 1
      %p133 = por %p131, %p132
      %p134 = scmp.ne.s32.totalorder %s125, %s126
      %p135 = scmp.eq.s32.totalorder %s24, 0
      %p136 = por %p134, %p135
      %p137 = scmp.ne.s32.totalorder %s125, %s126
      %p138 = scmp.eq.s32.totalorder %s25, 1
      %p139 = por %p137, %p138
      %p141 = scmp.ne.s32.totalorder %s126, %s140
      %p142 = scmp.eq.s32.totalorder %s25, 0
      %p143 = por %p141, %p142
      %s145 = sadd.s32 %s144, 1
      %p148 = scmp.eq.s32.totalorder %s19, 1
      %p149 = scmp.ne.s32.totalorder %s144, %s146
      %p150 = scmp.eq.s32.totalorder %s19, 0
      %p151 = por %p149, %p150
      %p152 = scmp.ne.s32.totalorder %s144, %s146
      %p153 = scmp.eq.s32.totalorder %s24, 1
      %p154 = por %p152, %p153
      %p155 = scmp.ne.s32.totalorder %s146, %s147
      %p156 = scmp.eq.s32.totalorder %s24, 0
      %p157 = por %p155, %p156
      %p158 = scmp.ne.s32.totalorder %s146, %s147
      %p159 = scmp.eq.s32.totalorder %s25, 1
      %p160 = por %p158, %p159
      %p162 = scmp.ne.s32.totalorder %s147, %s161
      %p163 = scmp.eq.s32.totalorder %s25, 0
      %p164 = por %p162, %p163
      %s166 = sadd.s32 %s165, 1
      %p169 = scmp.eq.s32.totalorder %s19, 1
      %p170 = scmp.ne.s32.totalorder %s165, %s167
      %p171 = scmp.eq.s32.totalorder %s19, 0
      %p172 = por %p170, %p171
      %p173 = scmp.ne.s32.totalorder %s165, %s167
      %p174 = scmp.eq.s32.totalorder %s24, 1
      %p175 = por %p173, %p174
      %p176 = scmp.ne.s32.totalorder %s167, %s168
      %p177 = scmp.eq.s32.totalorder %s24, 0
      %p178 = por %p176, %p177
      %p179 = scmp.ne.s32.totalorder %s167, %s168
      %p180 = scmp.eq.s32.totalorder %s25, 1
      %p181 = por %p179, %p180
      %p183 = scmp.ne.s32.totalorder %s168, %s182
      %p184 = scmp.eq.s32.totalorder %s25, 0
      %p185 = por %p183, %p184
      %s187 = sadd.s32 %s186, 1
      %p190 = scmp.eq.s32.totalorder %s19, 1
      %p191 = scmp.ne.s32.totalorder %s186, %s188
      %p192 = scmp.eq.s32.totalorder %s19, 0
      %p193 = por %p191, %p192
      %p194 = scmp.ne.s32.totalorder %s186, %s188
      %p195 = scmp.eq.s32.totalorder %s24, 1
      %p196 = por %p194, %p195
      %p197 = scmp.ne.s32.totalorder %s188, %s189
      %p198 = scmp.eq.s32.totalorder %s24, 0
      %p199 = por %p197, %p198
      %p200 = scmp.ne.s32.totalorder %s188, %s189
      %p201 = scmp.eq.s32.totalorder %s25, 1
      %p202 = por %p200, %p201
      %p204 = scmp.ne.s32.totalorder %s189, %s203
      %p205 = scmp.eq.s32.totalorder %s25, 0
      %p206 = por %p204, %p205
      %s208 = sadd.s32 %s207, 1
      %p211 = scmp.eq.s32.totalorder %s19, 1
      %p212 = scmp.ne.s32.totalorder %s207, %s209
      %p213 = scmp.eq.s32.totalorder %s19, 0
      %p214 = por %p212, %p213
      %p215 = scmp.ne.s32.totalorder %s207, %s209
      %p216 = scmp.eq.s32.totalorder %s24, 1
      %p217 = por %p215, %p216
      %p218 = scmp.ne.s32.totalorder %s209, %s210
      %p219 = scmp.eq.s32.totalorder %s24, 0
      %p220 = por %p218, %p219
      %p221 = scmp.ne.s32.totalorder %s209, %s210
      %p222 = scmp.eq.s32.totalorder %s25, 1
      %p223 = por %p221, %p222
      %p225 = scmp.ne.s32.totalorder %s210, %s224
      %p226 = scmp.eq.s32.totalorder %s25, 0
      %p227 = por %p225, %p226
      %s228 = ssub.s32 %s26, %s38
      %p229 = scmp.eq.s32.totalorder %s228, 0
      %s231 = sadd.s32 %s230, 1
      %s232 = scalar_select %p229, %s230, %s231
      %p235 = pneg %p229
      %p236 = scmp.eq.s32.totalorder %s19, 1
      %p237 = por %p235, %p236
      %p238 = scmp.ne.s32.totalorder %s230, %s233
      %p239 = scmp.eq.s32.totalorder %s19, 0
      %p240 = por %p238, %p239
      %p241 = scmp.ne.s32.totalorder %s230, %s233
      %p242 = scmp.eq.s32.totalorder %s24, 1
      %p243 = por %p241, %p242
      %p244 = scmp.ne.s32.totalorder %s233, %s234
      %p245 = scmp.eq.s32.totalorder %s24, 0
      %p246 = por %p244, %p245
      %p247 = scmp.ne.s32.totalorder %s233, %s234
      %p248 = scmp.eq.s32.totalorder %s25, 1
      %p249 = por %p247, %p248
      %p251 = scmp.ne.s32.totalorder %s234, %s250
      %p252 = scmp.eq.s32.totalorder %s25, 0
      %p253 = por %p251, %p252
      %p254 = scmp.le.s32.totalorder 1, %s19
      %p255 = scmp.lt.s32.totalorder %s19, 3
      %p256 = pnand %p254, %p255
      %p257 = pneg %p256
      // Predicated region
      $region9: #{combined_forward.1} parent=5 // pred_check
        _
      $region10: #{combined_forward.1} parent=5 // pred_check_branch
        %259 = sbr.rel (%p256) target = $region12
      $region11: #{combined_forward.1} parent=5 // pred_region
        %s260 = ssub.s32 %s19, 1
        // Predicated region
        $region13: #{combined_forward.1} parent=11 // pred_check
          %p261 = pneg %p52
        $region14: #{combined_forward.1} parent=11 // pred_check_branch
          %263 = sbr.rel (%p261) target = $region16
        $region15: #{combined_forward.1} parent=11 // pred_region
          _
        $region16: #{combined_forward.1} parent=11 // pred_fallthru
          _
        // Predicated region
        $region17: #{combined_forward.1} parent=11 // pred_check
          %p264 = pneg %p73
        $region18: #{combined_forward.1} parent=11 // pred_check_branch
          %266 = sbr.rel (%p264) target = $region20
        $region19: #{combined_forward.1} parent=11 // pred_region
          _
        $region20: #{combined_forward.1} parent=11 // pred_fallthru
          _
        // Predicated region
        $region21: #{combined_forward.1} parent=11 // pred_check
          %p267 = pneg %p94
        $region22: #{combined_forward.1} parent=11 // pred_check_branch
          %269 = sbr.rel (%p267) target = $region24
        $region23: #{combined_forward.1} parent=11 // pred_region
          _
        $region24: #{combined_forward.1} parent=11 // pred_fallthru
          _
        // Predicated region
        $region25: #{combined_forward.1} parent=11 // pred_check
          %p270 = pneg %p115
        $region26: #{combined_forward.1} parent=11 // pred_check_branch
          %272 = sbr.rel (%p270) target = $region28
        $region27: #{combined_forward.1} parent=11 // pred_region
          _
        $region28: #{combined_forward.1} parent=11 // pred_fallthru
          _
        // Predicated region
        $region29: #{combined_forward.1} parent=11 // pred_check
          %p273 = pneg %p136
        $region30: #{combined_forward.1} parent=11 // pred_check_branch
          %275 = sbr.rel (%p273) target = $region32
        $region31: #{combined_forward.1} parent=11 // pred_region
          _
        $region32: #{combined_forward.1} parent=11 // pred_fallthru
          _
        // Predicated region
        $region33: #{combined_forward.1} parent=11 // pred_check
          %p276 = pneg %p157
        $region34: #{combined_forward.1} parent=11 // pred_check_branch
          %278 = sbr.rel (%p276) target = $region36
        $region35: #{combined_forward.1} parent=11 // pred_region
          _
        $region36: #{combined_forward.1} parent=11 // pred_fallthru
          _
        // Predicated region
        $region37: #{combined_forward.1} parent=11 // pred_check
          %p279 = pneg %p178
        $region38: #{combined_forward.1} parent=11 // pred_check_branch
          %281 = sbr.rel (%p279) target = $region40
        $region39: #{combined_forward.1} parent=11 // pred_region
          _
        $region40: #{combined_forward.1} parent=11 // pred_fallthru
          _
        // Predicated region
        $region41: #{combined_forward.1} parent=11 // pred_check
          %p282 = pneg %p199
        $region42: #{combined_forward.1} parent=11 // pred_check_branch
          %284 = sbr.rel (%p282) target = $region44
        $region43: #{combined_forward.1} parent=11 // pred_region
          _
        $region44: #{combined_forward.1} parent=11 // pred_fallthru
          _
        // Predicated region
        $region45: #{combined_forward.1} parent=11 // pred_check
          %p285 = pneg %p220
        $region46: #{combined_forward.1} parent=11 // pred_check_branch
          %287 = sbr.rel (%p285) target = $region48
        $region47: #{combined_forward.1} parent=11 // pred_region
          _
        $region48: #{combined_forward.1} parent=11 // pred_fallthru
          _
      $region12: #{combined_forward.1} parent=5 // pred_fallthru
        _
      %p288 = scmp.lt.s32.totalorder %s19, 2
      // Predicated region
      $region49: #{combined_forward.1} parent=5 // pred_check
        %p289 = pneg %p288
      $region50: #{combined_forward.1} parent=5 // pred_check_branch
        %291 = sbr.rel (%p289) target = $region52
      $region51: #{combined_forward.1} parent=5 // pred_region
        _
      $region52: #{combined_forward.1} parent=5 // pred_fallthru
        _
      %p292 = scmp.le.s32.totalorder 1, %s19
      %p293 = scmp.lt.s32.totalorder %s19, 3
      %p294 = pnand %p292, %p293
      %p295 = pneg %p294
      // Predicated region
      $region53: #{combined_forward.1} parent=5 // pred_check
        _
      $region54: #{combined_forward.1} parent=5 // pred_check_branch
        %297 = sbr.rel (%p294) target = $region56
      $region55: #{combined_forward.1} parent=5 // pred_region
        %s298 = ssub.s32 %s19, 1
        %p299 = pneg %p52
        %p300 = pneg %p49
        %p301 = pneg %p73
        %p302 = pneg %p70
        %p303 = pneg %p94
        %p304 = pneg %p91
        %p305 = pneg %p115
        %p306 = pneg %p112
        %p307 = pneg %p136
        %p308 = pneg %p133
        %p309 = pneg %p157
        %p310 = pneg %p154
        %p311 = pneg %p178
        %p312 = pneg %p175
        %p313 = pneg %p199
        %p314 = pneg %p196
        %p315 = pneg %p220
        %p316 = pneg %p217
        %p317 = pneg %p246
        %p318 = pneg %p243
        %s319 = sand.u32 %s233, 1
        %s320 = scalar_lea.sflag [#allocation6], %s319
        %s321 = sand.u32 %s233, 1
        %s322 = scalar_lea.vmem [#allocation5], %s321
        %p324 = scmp.lt.s32.totalorder %s29, 0
        %s325 = ssub.s32 0, %s29
        %s326 = scalar_select %p324, %s325, %s29
        %s327 = sand.u32 %s326, 1
        %s328 = ssub.s32 0, %s327
        %s329 = scalar_select %p324, %s328, %s327
        %p330 = scmp.ne.s32.totalorder %s329, 0
        %p331 = scmp.lt.s32.totalorder %s329, 0
        %p332 = pnand %p331, %p330
        %p333 = pneg %p332
        %s334 = sadd.s32 %s329, 2
        %s335 = scalar_select %p333, %s334, %s329
        %p336 = scmp.eq.s32.totalorder %s29, 0
        // Predicated region
        $region57: #{combined_forward.1} parent=55 // pred_check
          %p337 = pneg %p336
        $region58: #{combined_forward.1} parent=55 // pred_check_branch
          %339 = sbr.rel (%p337) target = $region60
        $region59: #{combined_forward.1} parent=55 // pred_region
          %s340 = smul.u32 %s28, 3
          %s341 = smul.addr %s340, 8
          %s342 = scalar_lea.vmem %s0, %s341
          // Predicated region
          $region61: #{combined_forward.1} parent=59 // pred_check
            _
          $region62: #{combined_forward.1} parent=59 // pred_check_branch
            %344 = sbr.rel (0) target = $region64
          $region63: #{combined_forward.1} parent=59 // pred_region
            loop: start=0, step=1, limit=1
            $region65: #{combined_forward.1} parent=63 // loop_pre_header
              _
            $region66: #{combined_forward.1} parent=63 // loop_header
              %s346 = sphi 0, %s350
              %p347 = scmp.ge.s32.totalorder %s346, 1
              %s351 = sphi %s342, %s342
              %s352 = sphi [#allocation2], [#allocation2]
            $region67: #{combined_forward.1} parent=63 // loop_header_branch
              %349 = sbr.rel (%p347) target = $region71
            $region68: #{combined_forward.1} parent=63 // loop_body
              %v353 = vld [vmem:[%s351] sm:$0xff]
              %354 = vst [vmem:[%s352] sm:$0xff] %v353
              %v355 = vld [vmem:[%s351 + $0x8] sm:$0xff]
              %356 = vst [vmem:[%s352 + $0x8] sm:$0xff] %v355
              %v357 = vld [vmem:[%s351 + $0x10] sm:$0xff]
              %358 = vst [vmem:[%s352 + $0x10] sm:$0xff] %v357
            $region69: #{combined_forward.1} parent=63 // loop_footer
              %s350 = sadd.s32 1, %s346
            $region70: #{combined_forward.1} parent=63 // loop_footer_branch
              %345 = sbr.rel target = $region66
            $region71: #{combined_forward.1} parent=63 // loop_exit
              _
          $region64: #{combined_forward.1} parent=59 // pred_fallthru
            _
          // Predicated region
          $region72: #{combined_forward.1} parent=59 // pred_check
            _
          $region73: #{combined_forward.1} parent=59 // pred_check_branch
            %360 = sbr.rel target = $region75
          $region74: #{combined_forward.1} parent=59 // pred_region
            _
          $region75: #{combined_forward.1} parent=59 // pred_fallthru
            _
          // Predicated region
          $region76: #{combined_forward.1} parent=59 // pred_check
            _
          $region77: #{combined_forward.1} parent=59 // pred_check_branch
            %363 = sbr.rel (0) target = $region79
          $region78: #{combined_forward.1} parent=59 // pred_region
            %364 = vsyncadd [#allocation4], 384
          $region79: #{combined_forward.1} parent=59 // pred_fallthru
            _
        $region60: #{combined_forward.1} parent=55 // pred_fallthru
          _
        %s365 = sadd.s32 %s29, 1
        %p366 = scmp.lt.s32.totalorder %s365, 1
        // Predicated region
        $region80: #{combined_forward.1} parent=55 // pred_check
          %p367 = pneg %p366
        $region81: #{combined_forward.1} parent=55 // pred_check_branch
          %369 = sbr.rel (%p367) target = $region83
        $region82: #{combined_forward.1} parent=55 // pred_region
          %s370 = ssub.s32 1, %s335
          %s371 = smul.u32 %s365, 256
          %s372 = sshra.s32 %s371, 7
          %s373 = sand.u32 %s371, 127
          %s374 = smul.u32 %s28, 3
          %s375 = sadd.s32 %s372, %s374
          %s376 = smul.addr %s375, 8
          %s377 = scalar_lea.vmem %s0, %s376
          %s378 = smul.u32 %s370, 3
          %s379 = smul.addr %s378, 8
          %s380 = scalar_lea.vmem [#allocation2], %s379
          %s381 = scalar_lea.sflag [#allocation4], %s370
          // Predicated region
          $region84: #{combined_forward.1} parent=82 // pred_check
            _
          $region85: #{combined_forward.1} parent=82 // pred_check_branch
            %383 = sbr.rel (0) target = $region87
          $region86: #{combined_forward.1} parent=82 // pred_region
            loop: start=0, step=1, limit=1
            $region88: #{combined_forward.1} parent=86 // loop_pre_header
              _
            $region89: #{combined_forward.1} parent=86 // loop_header
              %s385 = sphi 0, %s389
              %p386 = scmp.ge.s32.totalorder %s385, 1
              %s390 = sphi %s377, %s377
              %s391 = sphi %s380, %s380
            $region90: #{combined_forward.1} parent=86 // loop_header_branch
              %388 = sbr.rel (%p386) target = $region94
            $region91: #{combined_forward.1} parent=86 // loop_body
              %v392 = vld [vmem:[%s390] sm:$0xff]
              %393 = vst [vmem:[%s391] sm:$0xff] %v392
              %v394 = vld [vmem:[%s390 + $0x8] sm:$0xff]
              %395 = vst [vmem:[%s391 + $0x8] sm:$0xff] %v394
              %v396 = vld [vmem:[%s390 + $0x10] sm:$0xff]
              %397 = vst [vmem:[%s391 + $0x10] sm:$0xff] %v396
            $region92: #{combined_forward.1} parent=86 // loop_footer
              %s389 = sadd.s32 1, %s385
            $region93: #{combined_forward.1} parent=86 // loop_footer_branch
              %384 = sbr.rel target = $region89
            $region94: #{combined_forward.1} parent=86 // loop_exit
              _
          $region87: #{combined_forward.1} parent=82 // pred_fallthru
            _
          // Predicated region
          $region95: #{combined_forward.1} parent=82 // pred_check
            _
          $region96: #{combined_forward.1} parent=82 // pred_check_branch
            %399 = sbr.rel target = $region98
          $region97: #{combined_forward.1} parent=82 // pred_region
            _
          $region98: #{combined_forward.1} parent=82 // pred_fallthru
            _
          // Predicated region
          $region99: #{combined_forward.1} parent=82 // pred_check
            _
          $region100: #{combined_forward.1} parent=82 // pred_check_branch
            %402 = sbr.rel (0) target = $region102
          $region101: #{combined_forward.1} parent=82 // pred_region
            %403 = vsyncadd %s381, 384
          $region102: #{combined_forward.1} parent=82 // pred_fallthru
            _
        $region83: #{combined_forward.1} parent=55 // pred_fallthru
          _
        %s404 = smul.u32 %s335, 3
        %s405 = smul.addr %s404, 8
        %s406 = scalar_lea.vmem [#allocation2], %s405
        %s407 = scalar_lea.sflag [#allocation4], %s335
        %s408 = smul.u32 8, 1
        %s409 = smul.u32 %s408, 3
        %s410 = sshll.u32 %s409, 4
        %411 = dma.done %s407, %s410
        %v412 = vld [vmem:[%s406] sm:$0xff]
        %v413 = vld [vmem:[%s406 + $0x8] sm:$0xff]
        %v414 = vld [vmem:[%s406 + $0x10] sm:$0xff]
        %v415 = vld [vmem:[%s1] sm:$0x7]
        %vm416 = vcmp.gt.s32.totalorder %v415, 0
        %vm417 = vcmp.lt.s32.totalorder %v415, 15
        %v418 = vlaneseq
        %v419 = vand.u32 %v418, 127
        %v420 = vadd.s32 %v419, 128
        %v421 = vadd.s32 %v419, 256
        %s422 = smul.u32 %s29, 16
        %423 = vrot.lane.b32.xlu0 %v412, 17
        %v424 = vpop.permute.xlu0 %423
        %425 = vrot.lane.b32.xlu0 %v413, 17
        %v426 = vpop.permute.xlu0 %425
        %427 = vrot.lane.b32.xlu0 %v414, 17
        %v428 = vpop.permute.xlu0 %427
        %vm429 = vcmp.lt.s32.totalorder %v419, 17
        %v430 = vsel %vm429, %v426, %v428
        %v431 = vsel %vm429, %v424, %v426
        %v432 = vsel %vm429, %v428, %v424
        %v433 = vsel %vm416, 1, 0
        %v434 = vperm.slane %v433, 0
        %v435 = vperm.slane %v433, 1
        %v436 = vperm.slane %v433, 2
        %vm437 = vcmp.eq.s32.totalorder %v434, 1
        %vm438 = vcmp.eq.s32.totalorder %v435, 1
        %vm439 = vcmp.eq.s32.totalorder %v436, 1
        %v440 = vsel %vm437, %v432, 0.0
        %v441 = vsel %vm438, %v431, 0.0
        %v442 = vsel %vm439, %v430, 0.0
        %443 = vrot.lane.b32.xlu0 %v412, 16
        %v444 = vpop.permute.xlu0 %443
        %445 = vrot.lane.b32.xlu0 %v413, 16
        %v446 = vpop.permute.xlu0 %445
        %447 = vrot.lane.b32.xlu0 %v414, 16
        %v448 = vpop.permute.xlu0 %447
        %vm449 = vcmp.lt.s32.totalorder %v419, 16
        %v450 = vsel %vm449, %v446, %v448
        %v451 = vsel %vm449, %v444, %v446
        %v452 = vsel %vm449, %v448, %v444
        %453 = vrot.lane.b32.xlu0 %v412, 15
        %v454 = vpop.permute.xlu0 %453
        %455 = vrot.lane.b32.xlu0 %v413, 15
        %v456 = vpop.permute.xlu0 %455
        %457 = vrot.lane.b32.xlu0 %v414, 15
        %v458 = vpop.permute.xlu0 %457
        %vm459 = vcmp.lt.s32.totalorder %v419, 15
        %v460 = vsel %vm459, %v456, %v458
        %v461 = vsel %vm459, %v454, %v456
        %v462 = vsel %vm459, %v458, %v454
        %v463 = vsel %vm417, 1, 0
        %v464 = vperm.slane %v463, 0
        %v465 = vperm.slane %v463, 1
        %v466 = vperm.slane %v463, 2
        %vm467 = vcmp.eq.s32.totalorder %v464, 1
        %vm468 = vcmp.eq.s32.totalorder %v465, 1
        %vm469 = vcmp.eq.s32.totalorder %v466, 1
        %v470 = vsel %vm467, %v462, 0.0
        %v471 = vsel %vm468, %v461, 0.0
        %v472 = vsel %vm469, %v460, 0.0
        %473 = vrot.lane.b32.xlu0 %v412, 1
        %v474 = vpop.permute.xlu0 %473
        %475 = vrot.lane.b32.xlu0 %v413, 1
        %v476 = vpop.permute.xlu0 %475
        %477 = vrot.lane.b32.xlu0 %v414, 1
        %v478 = vpop.permute.xlu0 %477
        %vm479 = vcmp.lt.s32.totalorder %v419, 1
        %v480 = vsel %vm479, %v476, %v478
        %v481 = vsel %vm479, %v474, %v476
        %v482 = vsel %vm479, %v478, %v474
        %v483 = vsel %vm437, %v482, 0.0
        %v484 = vsel %vm438, %v481, 0.0
        %v485 = vsel %vm439, %v480, 0.0
        %486 = vrot.lane.b32.xlu0 %v412, 127
        %v487 = vpop.permute.xlu0 %486
        %488 = vrot.lane.b32.xlu0 %v413, 127
        %v489 = vpop.permute.xlu0 %488
        %490 = vrot.lane.b32.xlu0 %v414, 127
        %v491 = vpop.permute.xlu0 %490
        %vm492 = vcmp.lt.s32.totalorder %v419, 127
        %v493 = vsel %vm492, %v489, %v491
        %v494 = vsel %vm492, %v487, %v489
        %v495 = vsel %vm492, %v491, %v487
        %v496 = vsel %vm467, %v494, 0.0
        %v497 = vsel %vm468, %v493, 0.0
        %v498 = vsel %vm469, %v495, 0.0
        %499 = vrot.lane.b32.xlu0 %v412, 113
        %v500 = vpop.permute.xlu0 %499
        %501 = vrot.lane.b32.xlu0 %v413, 113
        %v502 = vpop.permute.xlu0 %501
        %503 = vrot.lane.b32.xlu0 %v414, 113
        %v504 = vpop.permute.xlu0 %503
        %vm505 = vcmp.lt.s32.totalorder %v419, 113
        %v506 = vsel %vm505, %v502, %v504
        %v507 = vsel %vm505, %v500, %v502
        %v508 = vsel %vm505, %v504, %v500
        %v509 = vsel %vm437, %v507, 0.0
        %v510 = vsel %vm438, %v506, 0.0
        %v511 = vsel %vm439, %v508, 0.0
        %512 = vrot.lane.b32.xlu0 %v412, 112
        %v513 = vpop.permute.xlu0 %512
        %514 = vrot.lane.b32.xlu0 %v413, 112
        %v515 = vpop.permute.xlu0 %514
        %516 = vrot.lane.b32.xlu0 %v414, 112
        %v517 = vpop.permute.xlu0 %516
        %vm518 = vcmp.lt.s32.totalorder %v419, 112
        %v519 = vsel %vm518, %v515, %v517
        %v520 = vsel %vm518, %v513, %v515
        %v521 = vsel %vm518, %v517, %v513
        %522 = vrot.lane.b32.xlu0 %v412, 111
        %v523 = vpop.permute.xlu0 %522
        %524 = vrot.lane.b32.xlu0 %v413, 111
        %v525 = vpop.permute.xlu0 %524
        %526 = vrot.lane.b32.xlu0 %v414, 111
        %v527 = vpop.permute.xlu0 %526
        %vm528 = vcmp.lt.s32.totalorder %v419, 111
        %v529 = vsel %vm528, %v525, %v527
        %v530 = vsel %vm528, %v523, %v525
        %v531 = vsel %vm528, %v527, %v523
        %v532 = vsel %vm467, %v530, 0.0
        %v533 = vsel %vm468, %v529, 0.0
        %v534 = vsel %vm469, %v531, 0.0
        %v535 = vpack.c.bf16 %v452, %v440
        %v536 = vpack.c.bf16 %v451, %v441
        %v537 = vpack.c.bf16 %v450, %v442
        %v538 = vpack.c.bf16 %v483, %v470
        %v539 = vpack.c.bf16 %v484, %v471
        %v540 = vpack.c.bf16 %v485, %v472
        %v541 = vpack.c.bf16 %v496, %v412
        %v542 = vpack.c.bf16 %v497, %v413
        %v543 = vpack.c.bf16 %v498, %v414
        %v544 = vpack.c.bf16 %v520, %v509
        %v545 = vpack.c.bf16 %v519, %v510
        %v546 = vpack.c.bf16 %v521, %v511
        %v547 = vpack.c.bf16 %v532, %v532
        %v548 = vpack.c.bf16 %v533, %v533
        %v549 = vpack.c.bf16 %v534, %v534
        %v550 = vld [vmem:[%s2] sm:$0xf]
        %v551 = vld [vmem:[%s3] sm:$0xff]
        %553 = vset.pattern.permute.xlu0 0
        %554 = vperm.xlu0 %553, %v551
        %v555 = vpop.permute.xlu0 %554
        %vm557 = vcmask 588800
        %v559 = vsel %vm557, %v550, 0
        %vm561 = vcmask 1043456
        %v563 = vsel %vm561, %v547, 0
        %v566 = vsel %vm561, %v548, 0
        %v569 = vsel %vm561, %v549, 0
        %571 = vmatpush.bf16.msra.mxu0 0
        %572 = vmatpush.bf16.msra.mxu0 0
        %573 = vmatpush.bf16.msra.mxu0 0
        %574 = vmatpush.bf16.msra.mxu0 %v563
        %575 = vmatpush.bf16.msra.mxu0 %v544
        %576 = vmatpush.bf16.msra.mxu0 %v541
        %577 = vmatpush.bf16.msra.mxu0 %v538
        %578 = vmatpush.bf16.msra.mxu0 %v535
        %579 = vmatmul.bf16.gmra.mxu0 %v559
        %v580 = vpop.f32.mrf.mxu0
        %v581 = vadd.f32 %v555, %v580
        %v582 = vpop.f32.mrf.mxu0
        %583 = vdwg.mxu0
        %584 = vmatpush.bf16.msra.mxu0 0
        %585 = vmatpush.bf16.msra.mxu0 0
        %586 = vmatpush.bf16.msra.mxu0 0
        %587 = vmatpush.bf16.msra.mxu0 %v566
        %588 = vmatpush.bf16.msra.mxu0 %v545
        %589 = vmatpush.bf16.msra.mxu0 %v542
        %590 = vmatpush.bf16.msra.mxu0 %v539
        %591 = vmatpush.bf16.msra.mxu0 %v536
        %592 = vmatmul.bf16.gmra.mxu0 %v559
        %v593 = vpop.f32.mrf.mxu0
        %v594 = vadd.f32 %v555, %v593
        %v595 = vpop.f32.mrf.mxu0
        %596 = vdwg.mxu0
        %597 = vmatpush.bf16.msra.mxu0 0
        %598 = vmatpush.bf16.msra.mxu0 0
        %599 = vmatpush.bf16.msra.mxu0 0
        %600 = vmatpush.bf16.msra.mxu0 %v569
        %601 = vmatpush.bf16.msra.mxu0 %v546
        %602 = vmatpush.bf16.msra.mxu0 %v543
        %603 = vmatpush.bf16.msra.mxu0 %v540
        %604 = vmatpush.bf16.msra.mxu0 %v537
        %605 = vmatmul.bf16.gmra.mxu0 %v559
        %v606 = vpop.f32.mrf.mxu0
        %v607 = vadd.f32 %v555, %v606
        %v608 = vpop.f32.mrf.mxu0
        %609 = vdwg.mxu0
        %v610 = vmax.f32 %v581, 0.0
        %v611 = vmax.f32 %v594, 0.0
        %v612 = vmax.f32 %v607, 0.0
        %s613 = ssub.s32 3, %s422
        %s614 = smul.u32 %s613, 16
        %v615 = vstv %s614
        %vm616 = vcmp.ge.s32.totalorder %v419, %v615
        %vm617 = vcmp.ge.s32.totalorder %v420, %v615
        %vm618 = vcmp.ge.s32.totalorder %v421, %v615
        %s619 = ssub.s32 19, %s422
        %s620 = smul.u32 %s619, 16
        %v621 = vstv %s620
        %vm622 = vcmp.lt.s32.totalorder %v419, %v621
        %vm623 = vcmp.lt.s32.totalorder %v420, %v621
        %vm624 = vcmp.lt.s32.totalorder %v421, %v621
        %vm625 = vmand %vm616, %vm622
        %vm626 = vmand %vm617, %vm623
        %vm627 = vmand %vm618, %vm624
        %v628 = vsel %vm625, 1, 0
        %v629 = vsel %vm626, 1, 0
        %v630 = vsel %vm627, 1, 0
        %vm631 = vcmp.eq.s32.totalorder %v628, 1
        %vm632 = vcmp.eq.s32.totalorder %v629, 1
        %vm633 = vcmp.eq.s32.totalorder %v630, 1
        %v634 = vsel %vm631, %v610, 0.0
        %v635 = vsel %vm632, %v611, 0.0
        %v636 = vsel %vm633, %v612, 0.0
        %637 = vrot.lane.b32.xlu0 %v634, 17
        %v638 = vpop.permute.xlu0 %637
        %639 = vrot.lane.b32.xlu0 %v635, 17
        %v640 = vpop.permute.xlu0 %639
        %641 = vrot.lane.b32.xlu0 %v636, 17
        %v642 = vpop.permute.xlu0 %641
        %v643 = vsel %vm429, %v640, %v642
        %v644 = vsel %vm429, %v638, %v640
        %v645 = vsel %vm429, %v642, %v638
        %v646 = vsel %vm437, %v645, 0.0
        %v647 = vsel %vm438, %v644, 0.0
        %v648 = vsel %vm439, %v643, 0.0
        %649 = vrot.lane.b32.xlu0 %v634, 16
        %v650 = vpop.permute.xlu0 %649
        %651 = vrot.lane.b32.xlu0 %v635, 16
        %v652 = vpop.permute.xlu0 %651
        %653 = vrot.lane.b32.xlu0 %v636, 16
        %v654 = vpop.permute.xlu0 %653
        %v655 = vsel %vm449, %v652, %v654
        %v656 = vsel %vm449, %v650, %v652
        %v657 = vsel %vm449, %v654, %v650
        %658 = vrot.lane.b32.xlu0 %v634, 15
        %v659 = vpop.permute.xlu0 %658
        %660 = vrot.lane.b32.xlu0 %v635, 15
        %v661 = vpop.permute.xlu0 %660
        %662 = vrot.lane.b32.xlu0 %v636, 15
        %v663 = vpop.permute.xlu0 %662
        %v664 = vsel %vm459, %v661, %v663
        %v665 = vsel %vm459, %v659, %v661
        %v666 = vsel %vm459, %v663, %v659
        %v667 = vsel %vm467, %v666, 0.0
        %v668 = vsel %vm468, %v665, 0.0
        %v669 = vsel %vm469, %v664, 0.0
        %670 = vrot.lane.b32.xlu0 %v634, 1
        %v671 = vpop.permute.xlu0 %670
        %672 = vrot.lane.b32.xlu0 %v635, 1
        %v673 = vpop.permute.xlu0 %672
        %674 = vrot.lane.b32.xlu0 %v636, 1
        %v675 = vpop.permute.xlu0 %674
        %v676 = vsel %vm479, %v673, %v675
        %v677 = vsel %vm479, %v671, %v673
        %v678 = vsel %vm479, %v675, %v671
        %v679 = vsel %vm437, %v678, 0.0
        %v680 = vsel %vm438, %v677, 0.0
        %v681 = vsel %vm439, %v676, 0.0
        %682 = vrot.lane.b32.xlu0 %v634, 127
        %v683 = vpop.permute.xlu0 %682
        %684 = vrot.lane.b32.xlu0 %v635, 127
        %v685 = vpop.permute.xlu0 %684
        %686 = vrot.lane.b32.xlu0 %v636, 127
        %v687 = vpop.permute.xlu0 %686
        %v688 = vsel %vm492, %v685, %v687
        %v689 = vsel %vm492, %v683, %v685
        %v690 = vsel %vm492, %v687, %v683
        %v691 = vsel %vm467, %v689, 0.0
        %v692 = vsel %vm468, %v688, 0.0
        %v693 = vsel %vm469, %v690, 0.0
        %694 = vrot.lane.b32.xlu0 %v634, 113
        %v695 = vpop.permute.xlu0 %694
        %696 = vrot.lane.b32.xlu0 %v635, 113
        %v697 = vpop.permute.xlu0 %696
        %698 = vrot.lane.b32.xlu0 %v636, 113
        %v699 = vpop.permute.xlu0 %698
        %v700 = vsel %vm505, %v697, %v699
        %v701 = vsel %vm505, %v695, %v697
        %v702 = vsel %vm505, %v699, %v695
        %v703 = vsel %vm437, %v701, 0.0
        %v704 = vsel %vm438, %v700, 0.0
        %v705 = vsel %vm439, %v702, 0.0
        %706 = vrot.lane.b32.xlu0 %v634, 112
        %v707 = vpop.permute.xlu0 %706
        %708 = vrot.lane.b32.xlu0 %v635, 112
        %v709 = vpop.permute.xlu0 %708
        %710 = vrot.lane.b32.xlu0 %v636, 112
        %v711 = vpop.permute.xlu0 %710
        %v712 = vsel %vm518, %v709, %v711
        %v713 = vsel %vm518, %v707, %v709
        %v714 = vsel %vm518, %v711, %v707
        %715 = vrot.lane.b32.xlu0 %v634, 111
        %v716 = vpop.permute.xlu0 %715
        %717 = vrot.lane.b32.xlu0 %v635, 111
        %v718 = vpop.permute.xlu0 %717
        %719 = vrot.lane.b32.xlu0 %v636, 111
        %v720 = vpop.permute.xlu0 %719
        %v721 = vsel %vm528, %v718, %v720
        %v722 = vsel %vm528, %v716, %v718
        %v723 = vsel %vm528, %v720, %v716
        %v724 = vsel %vm467, %v722, 0.0
        %v725 = vsel %vm468, %v721, 0.0
        %v726 = vsel %vm469, %v723, 0.0
        %v727 = vld [vmem:[%s4] sm:$0x7]
        %v728 = vld [vmem:[%s5] sm:$0x7]
        %730 = vset.pattern.permute.xlu0 0
        %731 = vperm.xlu0 %730, %v728
        %v732 = vpop.permute.xlu0 %731
        %v735 = vsel %vm557, %v727, 0
        %737 = vmatpush.msra.mxu0 0.0
        %738 = vmatpush.msra.mxu0 0.0
        %739 = vmatpush.msra.mxu0 0.0
        %740 = vmatpush.msra.mxu0 0.0
        %741 = vmatpush.msra.mxu0 0.0
        %742 = vmatpush.msra.mxu0 0.0
        %743 = vmatpush.msra.mxu0 0.0
        %744 = vmatpush.msra.mxu0 %v724
        %745 = vmatpush.msra.mxu0 %v713
        %746 = vmatpush.msra.mxu0 %v703
        %747 = vmatpush.msra.mxu0 %v691
        %748 = vmatpush.msra.mxu0 %v634
        %749 = vmatpush.msra.mxu0 %v679
        %750 = vmatpush.msra.mxu0 %v667
        %751 = vmatpush.msra.mxu0 %v657
        %752 = vmatpush.msra.mxu0 %v646
        %753 = vmatmul.f32.gmra.mxu0 %v735
        %v754 = vpop.f32.mrf.mxu0
        %v755 = vadd.f32 %v732, %v754
        %756 = vdwg.mxu0
        %757 = vmatpush.msra.mxu0 0.0
        %758 = vmatpush.msra.mxu0 0.0
        %759 = vmatpush.msra.mxu0 0.0
        %760 = vmatpush.msra.mxu0 0.0
        %761 = vmatpush.msra.mxu0 0.0
        %762 = vmatpush.msra.mxu0 0.0
        %763 = vmatpush.msra.mxu0 0.0
        %764 = vmatpush.msra.mxu0 %v725
        %765 = vmatpush.msra.mxu0 %v712
        %766 = vmatpush.msra.mxu0 %v704
        %767 = vmatpush.msra.mxu0 %v692
        %768 = vmatpush.msra.mxu0 %v635
        %769 = vmatpush.msra.mxu0 %v680
        %770 = vmatpush.msra.mxu0 %v668
        %771 = vmatpush.msra.mxu0 %v656
        %772 = vmatpush.msra.mxu0 %v647
        %773 = vmatmul.f32.gmra.mxu0 %v735
        %v774 = vpop.f32.mrf.mxu0
        %v775 = vadd.f32 %v732, %v774
        %776 = vdwg.mxu0
        %777 = vmatpush.msra.mxu0 0.0
        %778 = vmatpush.msra.mxu0 0.0
        %779 = vmatpush.msra.mxu0 0.0
        %780 = vmatpush.msra.mxu0 0.0
        %781 = vmatpush.msra.mxu0 0.0
        %782 = vmatpush.msra.mxu0 0.0
        %783 = vmatpush.msra.mxu0 0.0
        %784 = vmatpush.msra.mxu0 %v726
        %785 = vmatpush.msra.mxu0 %v714
        %786 = vmatpush.msra.mxu0 %v705
        %787 = vmatpush.msra.mxu0 %v693
        %788 = vmatpush.msra.mxu0 %v636
        %789 = vmatpush.msra.mxu0 %v681
        %790 = vmatpush.msra.mxu0 %v669
        %791 = vmatpush.msra.mxu0 %v655
        %792 = vmatpush.msra.mxu0 %v648
        %793 = vmatmul.f32.gmra.mxu0 %v735
        %v794 = vpop.f32.mrf.mxu0
        %v795 = vadd.f32 %v732, %v794
        %796 = vdwg.mxu0
        %vm797 = vcmask 1042432
        %v798 = vsel %vm797, %v755, -inf
        %v799 = vrot.slane %v798, 4
        %v800 = vmax.f32 %v798, %v799
        %v801 = vrot.slane %v800, 2
        %v802 = vmax.f32 %v800, %v801
        %v803 = vrot.slane %v802, 1
        %v804 = vmax.f32 %v802, %v803
        %v805 = vsel %vm797, %v775, -inf
        %v806 = vrot.slane %v805, 4
        %v807 = vmax.f32 %v805, %v806
        %v808 = vrot.slane %v807, 2
        %v809 = vmax.f32 %v807, %v808
        %v810 = vrot.slane %v809, 1
        %v811 = vmax.f32 %v809, %v810
        %v812 = vsel %vm797, %v795, -inf
        %v813 = vrot.slane %v812, 4
        %v814 = vmax.f32 %v812, %v813
        %v815 = vrot.slane %v814, 2
        %v816 = vmax.f32 %v814, %v815
        %v817 = vrot.slane %v816, 1
        %v818 = vmax.f32 %v816, %v817
        %v819 = vsub.f32 %v755, %v804
        %v820 = vsub.f32 %v775, %v811
        %v821 = vsub.f32 %v795, %v818
        %v822 = vmul.f32 %v819, 1.442695
        %v823 = vpow.pop %v822
        %v824 = vmul.f32 %v820, 1.442695
        %v825 = vpow.pop %v824
        %v826 = vmul.f32 %v821, 1.442695
        %v827 = vpow.pop %v826
        %v828 = vsel %vm797, %v823, 0.0
        %v829 = vrot.slane %v828, 4
        %v830 = vadd.f32 %v828, %v829
        %v831 = vrot.slane %v830, 2
        %v832 = vadd.f32 %v830, %v831
        %v833 = vrot.slane %v832, 1
        %v834 = vadd.f32 %v832, %v833
        %v835 = vsel %vm797, %v825, 0.0
        %v836 = vrot.slane %v835, 4
        %v837 = vadd.f32 %v835, %v836
        %v838 = vrot.slane %v837, 2
        %v839 = vadd.f32 %v837, %v838
        %v840 = vrot.slane %v839, 1
        %v841 = vadd.f32 %v839, %v840
        %v842 = vsel %vm797, %v827, 0.0
        %v843 = vrot.slane %v842, 4
        %v844 = vadd.f32 %v842, %v843
        %v845 = vrot.slane %v844, 2
        %v846 = vadd.f32 %v844, %v845
        %v847 = vrot.slane %v846, 1
        %v848 = vadd.f32 %v846, %v847
        %v849 = vrcp.pop %v834
        %v850 = vrcp.pop %v841
        %v851 = vrcp.pop %v848
        %v852 = vadd.f32 %v849, 1.0
        %v853 = vadd.f32 %v850, 1.0
        %v854 = vadd.f32 %v851, 1.0
        %v855 = vmul.f32 %v852, %v412
        %v856 = vmul.f32 %v853, %v413
        %v857 = vmul.f32 %v854, %v414
        %858 = vrot.lane.b32.xlu0 %v855, 17
        %v859 = vpop.permute.xlu0 %858
        %860 = vrot.lane.b32.xlu0 %v856, 17
        %v861 = vpop.permute.xlu0 %860
        %862 = vrot.lane.b32.xlu0 %v857, 17
        %v863 = vpop.permute.xlu0 %862
        %v864 = vsel %vm429, %v861, %v863
        %v865 = vsel %vm429, %v859, %v861
        %v866 = vsel %vm429, %v863, %v859
        %v867 = vsel %vm437, %v866, 0.0
        %v868 = vsel %vm438, %v865, 0.0
        %v869 = vsel %vm439, %v864, 0.0
        %870 = vrot.lane.b32.xlu0 %v855, 16
        %v871 = vpop.permute.xlu0 %870
        %872 = vrot.lane.b32.xlu0 %v856, 16
        %v873 = vpop.permute.xlu0 %872
        %874 = vrot.lane.b32.xlu0 %v857, 16
        %v875 = vpop.permute.xlu0 %874
        %v876 = vsel %vm449, %v873, %v875
        %v877 = vsel %vm449, %v871, %v873
        %v878 = vsel %vm449, %v875, %v871
        %879 = vrot.lane.b32.xlu0 %v855, 15
        %v880 = vpop.permute.xlu0 %879
        %881 = vrot.lane.b32.xlu0 %v856, 15
        %v882 = vpop.permute.xlu0 %881
        %883 = vrot.lane.b32.xlu0 %v857, 15
        %v884 = vpop.permute.xlu0 %883
        %v885 = vsel %vm459, %v882, %v884
        %v886 = vsel %vm459, %v880, %v882
        %v887 = vsel %vm459, %v884, %v880
        %v888 = vsel %vm467, %v887, 0.0
        %v889 = vsel %vm468, %v886, 0.0
        %v890 = vsel %vm469, %v885, 0.0
        %891 = vrot.lane.b32.xlu0 %v855, 1
        %v892 = vpop.permute.xlu0 %891
        %893 = vrot.lane.b32.xlu0 %v856, 1
        %v894 = vpop.permute.xlu0 %893
        %895 = vrot.lane.b32.xlu0 %v857, 1
        %v896 = vpop.permute.xlu0 %895
        %v897 = vsel %vm479, %v894, %v896
        %v898 = vsel %vm479, %v892, %v894
        %v899 = vsel %vm479, %v896, %v892
        %v900 = vsel %vm437, %v899, 0.0
        %v901 = vsel %vm438, %v898, 0.0
        %v902 = vsel %vm439, %v897, 0.0
        %903 = vrot.lane.b32.xlu0 %v855, 127
        %v904 = vpop.permute.xlu0 %903
        %905 = vrot.lane.b32.xlu0 %v856, 127
        %v906 = vpop.permute.xlu0 %905
        %907 = vrot.lane.b32.xlu0 %v857, 127
        %v908 = vpop.permute.xlu0 %907
        %v909 = vsel %vm492, %v906, %v908
        %v910 = vsel %vm492, %v904, %v906
        %v911 = vsel %vm492, %v908, %v904
        %v912 = vsel %vm467, %v910, 0.0
        %v913 = vsel %vm468, %v909, 0.0
        %v914 = vsel %vm469, %v911, 0.0
        %915 = vrot.lane.b32.xlu0 %v855, 113
        %v916 = vpop.permute.xlu0 %915
        %917 = vrot.lane.b32.xlu0 %v856, 113
        %v918 = vpop.permute.xlu0 %917
        %919 = vrot.lane.b32.xlu0 %v857, 113
        %v920 = vpop.permute.xlu0 %919
        %v921 = vsel %vm505, %v918, %v920
        %v922 = vsel %vm505, %v916, %v918
        %v923 = vsel %vm505, %v920, %v916
        %v924 = vsel %vm437, %v922, 0.0
        %v925 = vsel %vm438, %v921, 0.0
        %v926 = vsel %vm439, %v923, 0.0
        %927 = vrot.lane.b32.xlu0 %v855, 112
        %v928 = vpop.permute.xlu0 %927
        %929 = vrot.lane.b32.xlu0 %v856, 112
        %v930 = vpop.permute.xlu0 %929
        %931 = vrot.lane.b32.xlu0 %v857, 112
        %v932 = vpop.permute.xlu0 %931
        %v933 = vsel %vm518, %v930, %v932
        %v934 = vsel %vm518, %v928, %v930
        %v935 = vsel %vm518, %v932, %v928
        %936 = vrot.lane.b32.xlu0 %v855, 111
        %v937 = vpop.permute.xlu0 %936
        %938 = vrot.lane.b32.xlu0 %v856, 111
        %v939 = vpop.permute.xlu0 %938
        %940 = vrot.lane.b32.xlu0 %v857, 111
        %v941 = vpop.permute.xlu0 %940
        %v942 = vsel %vm528, %v939, %v941
        %v943 = vsel %vm528, %v937, %v939
        %v944 = vsel %vm528, %v941, %v937
        %v945 = vsel %vm467, %v943, 0.0
        %v946 = vsel %vm468, %v942, 0.0
        %v947 = vsel %vm469, %v944, 0.0
        %v948 = vpack.c.bf16 %v878, %v867
        %v949 = vpack.c.bf16 %v877, %v868
        %v950 = vpack.c.bf16 %v876, %v869
        %v951 = vpack.c.bf16 %v900, %v888
        %v952 = vpack.c.bf16 %v901, %v889
        %v953 = vpack.c.bf16 %v902, %v890
        %v954 = vpack.c.bf16 %v912, %v855
        %v955 = vpack.c.bf16 %v913, %v856
        %v956 = vpack.c.bf16 %v914, %v857
        %v957 = vpack.c.bf16 %v934, %v924
        %v958 = vpack.c.bf16 %v933, %v925
        %v959 = vpack.c.bf16 %v935, %v926
        %v960 = vpack.c.bf16 %v945, %v945
        %v961 = vpack.c.bf16 %v946, %v946
        %v962 = vpack.c.bf16 %v947, %v947
        %v963 = vld [vmem:[%s6] sm:$0xf]
        %v964 = vld [vmem:[%s7] sm:$0xff]
        %966 = vset.pattern.permute.xlu0 0
        %967 = vperm.xlu0 %966, %v964
        %v968 = vpop.permute.xlu0 %967
        %v971 = vsel %vm557, %v963, 0
        %v974 = vsel %vm561, %v960, 0
        %v977 = vsel %vm561, %v961, 0
        %v980 = vsel %vm561, %v962, 0
        %982 = vmatpush.bf16.msra.mxu0 0
        %983 = vmatpush.bf16.msra.mxu0 0
        %984 = vmatpush.bf16.msra.mxu0 0
        %985 = vmatpush.bf16.msra.mxu0 %v974
        %986 = vmatpush.bf16.msra.mxu0 %v957
        %987 = vmatpush.bf16.msra.mxu0 %v954
        %988 = vmatpush.bf16.msra.mxu0 %v951
        %989 = vmatpush.bf16.msra.mxu0 %v948
        %990 = vmatmul.bf16.gmra.mxu0 %v971
        %v991 = vpop.f32.mrf.mxu0
        %v992 = vadd.f32 %v968, %v991
        %v993 = vpop.f32.mrf.mxu0
        %994 = vdwg.mxu0
        %995 = vmatpush.bf16.msra.mxu0 0
        %996 = vmatpush.bf16.msra.mxu0 0
        %997 = vmatpush.bf16.msra.mxu0 0
        %998 = vmatpush.bf16.msra.mxu0 %v977
        %999 = vmatpush.bf16.msra.mxu0 %v958
        %1000 = vmatpush.bf16.msra.mxu0 %v955
        %1001 = vmatpush.bf16.msra.mxu0 %v952
        %1002 = vmatpush.bf16.msra.mxu0 %v949
        %1003 = vmatmul.bf16.gmra.mxu0 %v971
        %v1004 = vpop.f32.mrf.mxu0
        %v1005 = vadd.f32 %v968, %v1004
        %v1006 = vpop.f32.mrf.mxu0
        %1007 = vdwg.mxu0
        %1008 = vmatpush.bf16.msra.mxu0 0
        %1009 = vmatpush.bf16.msra.mxu0 0
        %1010 = vmatpush.bf16.msra.mxu0 0
        %1011 = vmatpush.bf16.msra.mxu0 %v980
        %1012 = vmatpush.bf16.msra.mxu0 %v959
        %1013 = vmatpush.bf16.msra.mxu0 %v956
        %1014 = vmatpush.bf16.msra.mxu0 %v953
        %1015 = vmatpush.bf16.msra.mxu0 %v950
        %1016 = vmatmul.bf16.gmra.mxu0 %v971
        %v1017 = vpop.f32.mrf.mxu0
        %v1018 = vadd.f32 %v968, %v1017
        %v1019 = vpop.f32.mrf.mxu0
        %1020 = vdwg.mxu0
        %v1021 = vmax.f32 %v992, 0.0
        %v1022 = vmax.f32 %v1005, 0.0
        %v1023 = vmax.f32 %v1018, 0.0
        %s1024 = ssub.s32 16, %s422
        %p1025 = scmp.lt.s32.totalorder %s1024, 16
        %s1026 = scalar_select %p1025, %s1024, 16
        %vm1027 = vcmp.ge.s32.totalorder %v419, 48
        %vm1028 = vcmp.ge.s32.totalorder %v420, 48
        %vm1029 = vcmp.ge.s32.totalorder %v421, 48
        %s1030 = sadd.s32 %s1026, 3
        %s1031 = smul.u32 %s1030, 16
        %v1032 = vstv %s1031
        %vm1033 = vcmp.lt.s32.totalorder %v419, %v1032
        %vm1034 = vcmp.lt.s32.totalorder %v420, %v1032
        %vm1035 = vcmp.lt.s32.totalorder %v421, %v1032
        %vm1036 = vmand %vm1027, %vm1033
        %vm1037 = vmand %vm1028, %vm1034
        %vm1038 = vmand %vm1029, %vm1035
        %v1039 = vsel %vm1036, 1, 0
        %v1040 = vsel %vm1037, 1, 0
        %v1041 = vsel %vm1038, 1, 0
        %vm1042 = vcmp.eq.s32.totalorder %v1039, 1
        %vm1043 = vcmp.eq.s32.totalorder %v1040, 1
        %vm1044 = vcmp.eq.s32.totalorder %v1041, 1
        %v1045 = vsel %vm1042, %v1021, 0.0
        %v1046 = vsel %vm1043, %v1022, 0.0
        %v1047 = vsel %vm1044, %v1023, 0.0
        %v1048 = vadd.f32 %v1045, %v1046
        %v1049 = vadd.f32 %v1048, %v1047
        %1050 = vadd.xlane.f32.xlu0 %v1049
        %v1051 = vpop.xlane.xlu0 %1050
        // Predicated region
        $region103: #{combined_forward.1} parent=55 // pred_check
          %p1052 = pneg %p336
        $region104: #{combined_forward.1} parent=55 // pred_check_branch
          %1054 = sbr.rel (%p1052) target = $region106
        $region105: #{combined_forward.1} parent=55 // pred_region
          %vm1055 = vcmask 7168
          %1056 = vst.msk [vmem:[#allocation3] sm:$0xff] %vm1055, 0.0
        $region106: #{combined_forward.1} parent=55 // pred_fallthru
          _
        %v1057 = vld [vmem:[#allocation3] sm:$0xff]
        %v1058 = vadd.f32 %v1057, %v1051
        %vm1059 = vcmask 7168
        %1060 = vst.msk [vmem:[#allocation3] sm:$0xff] %vm1059, %v1058
        // Predicated region
        $region107: #{combined_forward.1} parent=55 // pred_check
          %p1061 = pneg %p336
        $region108: #{combined_forward.1} parent=55 // pred_check_branch
          %1063 = sbr.rel (%p1061) target = $region110
        $region109: #{combined_forward.1} parent=55 // pred_region
          %v1064 = vld [vmem:[#allocation3] sm:$0xff]
          %v1065 = vmul.f32 %v1064, 0.00390625
          %v1066 = vld [vmem:[%s8] sm:$0xff]
          %1068 = vset.pattern.permute.xlu0 0
          %1069 = vperm.xlu0 %1068, %v1065
          %v1070 = vpop.permute.xlu0 %1069
          %v1072 = vmul.f32 %v1066, %v1070
          %vm1073 = vcmask 39936
          %v1074 = vsel %vm1073, %v1072, 0.0
          %v1075 = vrot.slane %v1074, 4
          %v1076 = vadd.f32 %v1074, %v1075
          %v1077 = vrot.slane %v1076, 2
          %v1078 = vadd.f32 %v1076, %v1077
          %v1079 = vrot.slane %v1078, 1
          %v1080 = vadd.f32 %v1078, %v1079
          %v1081 = vld [vmem:[%s9] sm:$0x1]
          %v1082 = vadd.f32 %v1080, %v1081
          %vm1083 = vcmask 32768
          %1084 = vst.msk [vmem:[%s322] sm:$0x1] %vm1083, %v1082
        $region110: #{combined_forward.1} parent=55 // pred_fallthru
          _
        %s1085 = sand.u32 %s233, 1
        %s1086 = scalar_lea.sflag [#allocation6], %s1085
        %s1087 = sand.u32 %s233, 1
        %s1088 = scalar_lea.vmem [#allocation5], %s1087
        // Predicated region
        $region111: #{combined_forward.1} parent=55 // pred_check
          %p1089 = pneg %p243
        $region112: #{combined_forward.1} parent=55 // pred_check_branch
          %1091 = sbr.rel (%p1089) target = $region114
        $region113: #{combined_forward.1} parent=55 // pred_region
          %1093 = vsyncadd %s1086, 0
          %s1094 = scalar_lea.hbm %s10, %s28
          %s1096 = sshll.u32 %s1088, 4
          %s1097 = int_to_ptr.vmem [resolvable:$true] %s1096
          %s1098 = sshll.u32 %s1094, 4
          %s1099 = int_to_ptr.hbm [resolvable:$true] %s1098
          %1101 = dma.vmem_to_hbm [thread:$0]  %s1097, 16, %s1099, %s1086
        $region114: #{combined_forward.1} parent=55 // pred_fallthru
          _
      $region56: #{combined_forward.1} parent=5 // pred_fallthru
        _
      %p1102 = scmp.le.s32.totalorder 2, %s19
      // Predicated region
      $region115: #{combined_forward.1} parent=5 // pred_check
        %p1103 = pneg %p1102
      $region116: #{combined_forward.1} parent=5 // pred_check_branch
        %1105 = sbr.rel (%p1103) target = $region118
      $region117: #{combined_forward.1} parent=5 // pred_region
        %s1106 = ssub.s32 %s19, 2
        // Predicated region
        $region119: #{combined_forward.1} parent=117 // pred_check
          %p1107 = pneg %p249
        $region120: #{combined_forward.1} parent=117 // pred_check_branch
          %1109 = sbr.rel (%p1107) target = $region122
        $region121: #{combined_forward.1} parent=117 // pred_region
          %s1110 = sand.u32 %s234, 1
          %s1111 = scalar_lea.sflag [#allocation6], %s1110
          %s1112 = sand.u32 %s234, 1
          %s1113 = scalar_lea.vmem [#allocation5], %s1112
          %1115 = dma.done %s1111, 16
        $region122: #{combined_forward.1} parent=117 // pred_fallthru
          _
      $region118: #{combined_forward.1} parent=5 // pred_fallthru
        _
    $region6: #{combined_forward.1} parent=1 // loop_footer
      %s23 = sadd.s32 1, %s19
    $region7: #{combined_forward.1} parent=1 // loop_footer_branch
      %18 = sbr.rel target = $region3
    $region8: #{combined_forward.1} parent=1 // loop_exit
      _
    %1116 = vsyncpa [#allocation6], 1
    %s1117 = scalar_lea.sflag [#allocation6], 1
    %1118 = vsyncpa %s1117, 1
  %1119 = vsyncmov [#allocation4]
  %s1120 = vpop.sfrf %1119
  %p1121 = scmp.eq.s32.totalorder %s1120, 0
  %p1122 = pneg %p1121
  %1124 = shalt.err (%p1122)
  %s1125 = scalar_lea.sflag [#allocation4], 1
  %1126 = vsyncmov %s1125
  %s1127 = vpop.sfrf %1126
  %p1128 = scmp.eq.s32.totalorder %s1127, 0
  %p1129 = pneg %p1128
  %1131 = shalt.err (%p1129)

</llo_original>
